<compile_context>
chip_gen: v5e
topology: v5e:2x2
jax: 0.10.0
libtpu: 0.0.40
codegen_flags: <defaults>
</compile_context>

<pallas_src>
import functools

import jax
import jax.numpy as jnp
from jax.experimental import pallas as pl
from jax.experimental.pallas import tpu as pltpu

# ----------------------------- model config ---------------------------------
NUM_ID_FEATURES = [10, 7]          # vocab sizes of the id embeddings
ID_EMBEDDING_DIMS = [6, 5]         # -> embedded_id_dim = 11
NUMERIC_SEQ_FEATURES = 5           # lstm_input_dim = 11 + 5 = 16
NUMERIC_EXTRA_FEATURES = 3
HIDDEN_SIZE = 32
NUM_LAYERS = 2                     # fused kernel below is specialized to 2
WEEK_VOCAB, WEEK_DIM = 4, 4
FC_INPUT_DIM = HIDDEN_SIZE + NUMERIC_EXTRA_FEATURES + WEEK_DIM
_E_PAD = 8                         # extra features (3 + 4 = 7) padded to 8


def _round_up(x, m):
    return ((x + m - 1) // m) * m


def _slab_layout(D, H, e_pad):
    """Static row offsets of every parameter inside the packed weight slab.

    All blocks start on 8-row (sublane) boundaries; lane width is 4H = 128.
    """
    L = {}
    r = 0
    L["wih1"] = r; r += D
    L["whh1"] = r; r += H
    L["wih2"] = r; r += H
    L["whh2"] = r; r += H
    L["b_lstm"] = r; r += 8        # row 0: bg1, row 1: bg2
    L["w1h"] = r; r += H
    L["w1e"] = r; r += e_pad
    L["w2"] = r; r += H
    L["w3"] = r; r += H
    L["b_fc"] = r; r += 8          # rows 0..2: fb1, fb2, fb3
    L["rows"] = _round_up(r, 8)
    return L


# ----------------------------- Pallas kernel ---------------------------------
def fused_multi_lstm_kernel(
        x_ref,       # (T*B, D)    time-major flattened sequence (row = t*B + b)
        extra_ref,   # (B, 8)      [x_extra, week_emb, zero pad]
        w_ref,       # (rows, 4H)  packed weight slab (g-gate cols pre-scaled 2x)
        out_ref,     # (B, 1)
        *, B, T, D, H, L):
    # ---- static, 8-row-aligned views into the packed weight slab -----------
    wih1 = w_ref[pl.ds(L["wih1"], D), :]
    whh1 = w_ref[pl.ds(L["whh1"], H), :]
    wih2 = w_ref[pl.ds(L["wih2"], H), :]
    whh2 = w_ref[pl.ds(L["whh2"], H), :]
    b_lstm = w_ref[pl.ds(L["b_lstm"], 8), :]
    bg1 = b_lstm[0:1, :]
    bg2 = b_lstm[1:2, :]

    def cell(pre_gates, c_prev):
        # g-gate columns of the slab were pre-scaled by 2, so a single sigmoid
        # pass covers all four gates: tanh(x) = 2*sigmoid(2x) - 1.
        # PyTorch gate order is i, f, g, o.
        sig = jax.nn.sigmoid(pre_gates)              # (B, 4H): one EUP pass
        i_g = sig[:, 0 * H:1 * H]
        f_g = sig[:, 1 * H:2 * H]
        g_g = 2.0 * sig[:, 2 * H:3 * H] - 1.0        # == tanh of original pre-act
        o_g = sig[:, 3 * H:4 * H]
        c_new = f_g * c_prev + i_g * g_g
        h_new = o_g * jnp.tanh(c_new)
        return h_new, c_new

    zeros = jnp.zeros((B, H), jnp.float32)

    # ---- layer 1: hoisted input projection; per-step only h1 @ W_hh1 -------
    proj1 = jnp.dot(x_ref[...], wih1,
                    preferred_element_type=jnp.float32) + bg1      # (T*B, 4H)
    h1, c1 = zeros, zeros
    h1_steps = []
    for t in range(T):                      # static unroll, states in vregs
        g1 = proj1[t * B:(t + 1) * B, :] + jnp.dot(
            h1, whh1, preferred_element_type=jnp.float32)
        h1, c1 = cell(g1, c1)
        h1_steps.append(h1)

    # ---- layer 2: batched input projection of all h1[t], then recurrence ---
    h1_all = jnp.concatenate(h1_steps, axis=0)                     # (T*B, H)
    proj2 = jnp.dot(h1_all, wih2,
                    preferred_element_type=jnp.float32) + bg2      # (T*B, 4H)
    h2, c2 = zeros, zeros
    for t in range(T):
        g2 = proj2[t * B:(t + 1) * B, :] + jnp.dot(
            h2, whh2, preferred_element_type=jnp.float32)
        h2, c2 = cell(g2, c2)

    # ---- fused MLP head (Linear -> ReLU -> Linear -> ReLU -> Linear) -------
    w1h = w_ref[pl.ds(L["w1h"], H), :]
    w1e = w_ref[pl.ds(L["w1e"], extra_ref.shape[1]), :]
    w2 = w_ref[pl.ds(L["w2"], H), :]
    w3 = w_ref[pl.ds(L["w3"], H), :]
    b_fc = w_ref[pl.ds(L["b_fc"], 8), :]
    fb1 = b_fc[0:1, :]
    fb2 = b_fc[1:2, :]
    fb3 = b_fc[2:3, :]

    a1 = jnp.maximum(
        (jnp.dot(h2, w1h, preferred_element_type=jnp.float32)
         + jnp.dot(extra_ref[...], w1e, preferred_element_type=jnp.float32)
         + fb1)[:, :H], 0.0)
    a2 = jnp.maximum(
        (jnp.dot(a1, w2, preferred_element_type=jnp.float32) + fb2)[:, :H],
        0.0)
    out_ref[...] = (jnp.dot(a2, w3, preferred_element_type=jnp.float32)
                    + fb3)[:, :1]


# ----------------------------- kernel wrapper --------------------------------
def _full_spec(shape):
    n = len(shape)
    return pl.BlockSpec(shape, lambda i, _n=n: (0,) * _n)


def fused_multi_lstm_pallas(x_tb, extra8, w_slab, *, B, T, D, H, layout):
    kernel = functools.partial(fused_multi_lstm_kernel,
                               B=B, T=T, D=D, H=H, L=layout)
    args = (x_tb, extra8, w_slab)
    return pl.pallas_call(
        kernel,
        out_shape=jax.ShapeDtypeStruct((B, 1), jnp.float32),
        grid_spec=pltpu.PrefetchScalarGridSpec(
            num_scalar_prefetch=0,
            grid=(1,),                                   # single invocation
            in_specs=[_full_spec(a.shape) for a in args],
            out_specs=_full_spec((B, 1)),
        ),
        compiler_params=pltpu.CompilerParams(
            dimension_semantics=("arbitrary",)),
    )(*args)


# ----------------------------- weight packing --------------------------------
def pack_weight_slab(params, D, H, e_pad, layout):
    """Pack all LSTM + FC parameters into one (rows, 4H) f32 slab.

    The g-gate (columns 2H:3H) of every LSTM weight/bias is pre-scaled by 2 so
    the kernel can fold tanh into the single sigmoid pass.
    """
    (wih1, whh1, bg1), (wih2, whh2, bg2) = params["lstm"]
    w1h, w1e, fb1, w2, fb2, w3, fb3 = params["fc"]
    G = 4 * H

    def scale_g(w):
        return w.at[..., 2 * H:3 * H].multiply(2.0)

    slab = jnp.zeros((layout["rows"], G), jnp.float32)

    def put(slab, name, block, row_off=0):
        rr, cc = block.shape
        r0 = layout[name] + row_off
        return slab.at[r0:r0 + rr, :cc].set(block)

    slab = put(slab, "wih1", scale_g(wih1))
    slab = put(slab, "whh1", scale_g(whh1))
    slab = put(slab, "wih2", scale_g(wih2))
    slab = put(slab, "whh2", scale_g(whh2))
    slab = put(slab, "b_lstm", scale_g(bg1), 0)
    slab = put(slab, "b_lstm", scale_g(bg2), 1)
    slab = put(slab, "w1h", w1h)
    slab = put(slab, "w1e", w1e)
    slab = put(slab, "w2", w2)
    slab = put(slab, "w3", w3)
    slab = put(slab, "b_fc", fb1, 0)
    slab = put(slab, "b_fc", fb2, 1)
    slab = put(slab, "b_fc", fb3, 2)
    return slab


# ----------------------------- full forward ----------------------------------
def multi_lstm_forward(params, x_sequence, x_numeric_extra):
    k = len(params["id_emb"])
    B, T, _ = x_sequence.shape
    ids = x_sequence[:, :, :k].astype(jnp.int32)                 # (B, T, k)
    numeric_seq = x_sequence[:, :, k:]                           # (B, T, Ns)
    week = x_numeric_extra[:, NUMERIC_EXTRA_FEATURES].astype(jnp.int32)
    week_emb = params["week_emb"][week]                          # (B, 4)
    x_extra = x_numeric_extra[:, :NUMERIC_EXTRA_FEATURES]        # (B, Ne)

    embedded = jnp.concatenate(
        [params["id_emb"][i][ids[:, :, i]] for i in range(k)], axis=-1)
    lstm_in = jnp.concatenate([embedded, numeric_seq], axis=-1)  # (B, T, D)
    D = lstm_in.shape[-1]
    H = HIDDEN_SIZE

    # time-major flatten: row index = t*B + b -> each timestep is a contiguous
    # sublane-aligned block of B rows inside the kernel.
    x_tb = jnp.transpose(lstm_in, (1, 0, 2)).reshape(T * B, D)   # (T*B, D)
    extra7 = jnp.concatenate([x_extra, week_emb], axis=1)        # (B, 7)
    extra8 = jnp.pad(extra7, ((0, 0), (0, _E_PAD - extra7.shape[1])))

    layout = _slab_layout(D, H, _E_PAD)
    # params are closed-over constants under jit -> packing constant-folds.
    w_slab = pack_weight_slab(params, D, H, _E_PAD, layout)

    out = fused_multi_lstm_pallas(
        x_tb, extra8, w_slab, B=B, T=T, D=D, H=H, layout=layout)  # (B, 1)
    return out.reshape(-1)


# ----------------------------- pure JAX reference -----------------------------
def _lstm_layer_ref(x_tbd, wih_t, whh_t, b2d):
    T, B, D = x_tbd.shape
    H = whh_t.shape[0]

    def step(carry, x_t):
        h, c = carry
        gates = x_t @ wih_t + h @ whh_t + b2d
        i = jax.nn.sigmoid(gates[:, :H])
        f = jax.nn.sigmoid(gates[:, H:2 * H])
        g = jnp.tanh(gates[:, 2 * H:3 * H])
        o = jax.nn.sigmoid(gates[:, 3 * H:])
        c = f * c + i * g
        h = o * jnp.tanh(c)
        return (h, c), h

    init = (jnp.zeros((B, H), jnp.float32), jnp.zeros((B, H), jnp.float32))
    _, hs = jax.lax.scan(step, init, x_tbd)
    return hs


def multi_lstm_ref(params, x_sequence, x_numeric_extra):
    k = len(params["id_emb"])
    ids = x_sequence[:, :, :k].astype(jnp.int32)
    numeric_seq = x_sequence[:, :, k:]
    week = x_numeric_extra[:, NUMERIC_EXTRA_FEATURES].astype(jnp.int32)
    week_emb = params["week_emb"][week]
    x_extra = x_numeric_extra[:, :NUMERIC_EXTRA_FEATURES]
    embedded = jnp.concatenate(
        [params["id_emb"][i][ids[:, :, i]] for i in range(k)], axis=-1)
    x = jnp.transpose(jnp.concatenate([embedded, numeric_seq], axis=-1),
                      (1, 0, 2))
    for (wih_t, whh_t, b2d) in params["lstm"]:
        x = _lstm_layer_ref(x, wih_t, whh_t, b2d)
    lstm_features = x[-1]
    extra7 = jnp.concatenate([x_extra, week_emb], axis=1)
    w1h, w1e, fb1, w2, fb2, w3, fb3 = params["fc"]
    h1 = jnp.maximum(lstm_features @ w1h + extra7 @ w1e + fb1, 0.0)
    h2 = jnp.maximum(h1 @ w2 + fb2, 0.0)
    return (h2 @ w3 + fb3).reshape(-1)


# ----------------------------- param init ------------------------------------
def init_params(key):
    keys = iter(jax.random.split(key, 64))
    params = {}
    # nn.Embedding default init: N(0, 1)
    params["id_emb"] = [
        jax.random.normal(next(keys), (NUM_ID_FEATURES[i], ID_EMBEDDING_DIMS[i]),
                          jnp.float32)
        for i in range(len(NUM_ID_FEATURES))
    ]
    params["week_emb"] = jax.random.normal(next(keys), (WEEK_VOCAB, WEEK_DIM),
                                           jnp.float32)

    # nn.LSTM default init: U(-1/sqrt(H), 1/sqrt(H))
    bound = 1.0 / jnp.sqrt(jnp.float32(HIDDEN_SIZE))
    lstm_input_dim = sum(ID_EMBEDDING_DIMS) + NUMERIC_SEQ_FEATURES
    lstm_params = []
    d_in = lstm_input_dim
    for _ in range(NUM_LAYERS):
        w_ih = jax.random.uniform(next(keys), (4 * HIDDEN_SIZE, d_in),
                                  jnp.float32, -bound, bound)
        w_hh = jax.random.uniform(next(keys), (4 * HIDDEN_SIZE, HIDDEN_SIZE),
                                  jnp.float32, -bound, bound)
        b_ih = jax.random.uniform(next(keys), (4 * HIDDEN_SIZE,),
                                  jnp.float32, -bound, bound)
        b_hh = jax.random.uniform(next(keys), (4 * HIDDEN_SIZE,),
                                  jnp.float32, -bound, bound)
        lstm_params.append((w_ih.T, w_hh.T, (b_ih + b_hh).reshape(1, -1)))
        d_in = HIDDEN_SIZE
    params["lstm"] = lstm_params

    # nn.Linear default init: U(-1/sqrt(fan_in), 1/sqrt(fan_in))
    def linear(key_w, key_b, fan_in, fan_out):
        bnd = 1.0 / jnp.sqrt(jnp.float32(fan_in))
        w = jax.random.uniform(key_w, (fan_out, fan_in), jnp.float32, -bnd, bnd)
        b = jax.random.uniform(key_b, (fan_out,), jnp.float32, -bnd, bnd)
        return w.T, b.reshape(1, -1)

    w1_t, fb1 = linear(next(keys), next(keys), FC_INPUT_DIM, HIDDEN_SIZE)
    # split fc1 so the kernel never needs an in-kernel concat:
    # combined = [lstm_features (H), x_extra (Ne), week_emb (4)]
    w1h_t = w1_t[:HIDDEN_SIZE]                     # (H, H)
    w1e_t = w1_t[HIDDEN_SIZE:]                     # (Ne+4, H)
    w2_t, fb2 = linear(next(keys), next(keys), HIDDEN_SIZE, HIDDEN_SIZE)
    w3_t, fb3 = linear(next(keys), next(keys), HIDDEN_SIZE, 1)
    params["fc"] = (w1h_t, w1e_t, fb1, w2_t, fb2, w3_t, fb3)
    return params


# ----------------------------- main -------------------------------------------
if __name__ == "__main__":
    B, T = 8, 8
    key = jax.random.PRNGKey(0)
    k_param, k_ids, k_seq, k_extra, k_week = jax.random.split(key, 5)

    params = init_params(k_param)

    k_feat = len(NUM_ID_FEATURES)
    id_cols = jnp.stack(
        [jax.random.randint(jax.random.fold_in(k_ids, i), (B, T), 0,
                            NUM_ID_FEATURES[i]).astype(jnp.float32)
         for i in range(k_feat)], axis=-1)                        # (B, T, k)
    numeric_cols = jax.random.normal(k_seq, (B, T, NUMERIC_SEQ_FEATURES),
                                     jnp.float32)
    x_sequence = jnp.concatenate([id_cols, numeric_cols], axis=-1)  # (B, T, 7)

    extra_cols = jax.random.normal(k_extra, (B, NUMERIC_EXTRA_FEATURES),
                                   jnp.float32)
    week_col = jax.random.randint(k_week, (B, 1), 0, WEEK_VOCAB).astype(
        jnp.float32)
    x_numeric_extra = jnp.concatenate([extra_cols, week_col], axis=1)  # (B, 4)

    fwd = jax.jit(functools.partial(multi_lstm_forward, params))
    out = fwd(x_sequence, x_numeric_extra)
    out = jax.block_until_ready(out)

    ref = multi_lstm_ref(params, x_sequence, x_numeric_extra)
    assert out.shape == (B,)
    assert jnp.allclose(out, ref, atol=1e-4, rtol=1e-4), (out, ref)

    print("KERNEL_OK")
</pallas_src>

<mosaic_0001>
module attributes {stable_mosaic.version = 11 : i64} {
  func.func @fused_multi_lstm_kernel(%arg0: i32, %arg1: memref<64x16xf32, #tpu.memory_space<vmem>>, %arg2: memref<8x8xf32, #tpu.memory_space<vmem>>, %arg3: memref<232x128xf32, #tpu.memory_space<vmem>>, %arg4: memref<8x1xf32, #tpu.memory_space<vmem>>) attributes {dimension_semantics = [#tpu.dimension_semantics<arbitrary>], iteration_bounds = array<i64: 1>, scalar_prefetch = 0 : i64, scratch_operands = 0 : i64, tpu.core_type = #tpu.core_type<tc>, window_params = [{pipeline_mode = #tpu.pipeline_mode<synchronous>, transform_indices = @transform_0, window_bounds = array<i64: 64, 16>}, {pipeline_mode = #tpu.pipeline_mode<synchronous>, transform_indices = @transform_1, window_bounds = array<i64: 8, 8>}, {pipeline_mode = #tpu.pipeline_mode<synchronous>, transform_indices = @transform_2, window_bounds = array<i64: 232, 128>}, {pipeline_mode = #tpu.pipeline_mode<synchronous>, transform_indices = @transform_3, window_bounds = array<i64: 8, 1>}]} {
    %c0 = arith.constant 0 : index
    %c0_0 = arith.constant 0 : index
    %0 = vector.load %arg3[%c0, %c0_0] : memref<232x128xf32, #tpu.memory_space<vmem>>, vector<16x128xf32>
    %c16 = arith.constant 16 : index
    %c0_1 = arith.constant 0 : index
    %1 = vector.load %arg3[%c16, %c0_1] : memref<232x128xf32, #tpu.memory_space<vmem>>, vector<32x128xf32>
    %c48 = arith.constant 48 : index
    %c0_2 = arith.constant 0 : index
    %2 = vector.load %arg3[%c48, %c0_2] : memref<232x128xf32, #tpu.memory_space<vmem>>, vector<32x128xf32>
    %c80 = arith.constant 80 : index
    %c0_3 = arith.constant 0 : index
    %3 = vector.load %arg3[%c80, %c0_3] : memref<232x128xf32, #tpu.memory_space<vmem>>, vector<32x128xf32>
    %c112 = arith.constant 112 : index
    %c0_4 = arith.constant 0 : index
    %4 = vector.load %arg3[%c112, %c0_4] : memref<232x128xf32, #tpu.memory_space<vmem>>, vector<8x128xf32>
    %5 = vector.extract_strided_slice %4 {offsets = [0, 0], sizes = [1, 128], strides = [1, 1]} : vector<8x128xf32> to vector<1x128xf32>
    %6 = vector.extract_strided_slice %4 {offsets = [1, 0], sizes = [1, 128], strides = [1, 1]} : vector<8x128xf32> to vector<1x128xf32>
    %cst = arith.constant 0.000000e+00 : f32
    %7 = vector.broadcast %cst : f32 to vector<8x32xf32>
    %c0_5 = arith.constant 0 : index
    %c0_6 = arith.constant 0 : index
    %8 = vector.load %arg1[%c0_5, %c0_6] : memref<64x16xf32, #tpu.memory_space<vmem>>, vector<64x16xf32>
    %cst_7 = arith.constant dense<0.000000e+00> : vector<64x128xf32>
    %9 = tpu.matmul %8, %0, %cst_7 {dimension_numbers = #tpu.dot_dimension_numbers<[1], [0], [0], [1], [0, 0, 1, 1], [], []>} : vector<64x16xf32>, vector<16x128xf32>, vector<64x128xf32> -> vector<64x128xf32>
    %10 = vector.broadcast %5 : vector<1x128xf32> to vector<64x128xf32>
    %11 = arith.addf %9, %10 : vector<64x128xf32>
    %12 = vector.extract_strided_slice %11 {offsets = [0, 0], sizes = [8, 128], strides = [1, 1]} : vector<64x128xf32> to vector<8x128xf32>
    %cst_8 = arith.constant dense<0.000000e+00> : vector<8x128xf32>
    %13 = tpu.matmul %7, %1, %cst_8 {dimension_numbers = #tpu.dot_dimension_numbers<[1], [0], [0], [1], [0, 0, 1, 1], [], []>} : vector<8x32xf32>, vector<32x128xf32>, vector<8x128xf32> -> vector<8x128xf32>
    %14 = arith.addf %12, %13 : vector<8x128xf32>
    %15 = arith.negf %14 : vector<8x128xf32>
    %16 = math.exp %15 : vector<8x128xf32>
    %cst_9 = arith.constant 1.000000e+00 : f32
    %17 = vector.broadcast %cst_9 : f32 to vector<8x128xf32>
    %18 = arith.addf %17, %16 : vector<8x128xf32>
    %19 = arith.divf %17, %18 : vector<8x128xf32>
    %20 = vector.extract_strided_slice %19 {offsets = [0, 0], sizes = [8, 32], strides = [1, 1]} : vector<8x128xf32> to vector<8x32xf32>
    %21 = vector.extract_strided_slice %19 {offsets = [0, 32], sizes = [8, 32], strides = [1, 1]} : vector<8x128xf32> to vector<8x32xf32>
    %22 = vector.extract_strided_slice %19 {offsets = [0, 64], sizes = [8, 32], strides = [1, 1]} : vector<8x128xf32> to vector<8x32xf32>
    %cst_10 = arith.constant 2.000000e+00 : f32
    %23 = vector.broadcast %cst_10 : f32 to vector<8x32xf32>
    %24 = arith.mulf %23, %22 : vector<8x32xf32>
    %cst_11 = arith.constant 1.000000e+00 : f32
    %25 = vector.broadcast %cst_11 : f32 to vector<8x32xf32>
    %26 = arith.subf %24, %25 : vector<8x32xf32>
    %27 = vector.extract_strided_slice %19 {offsets = [0, 96], sizes = [8, 32], strides = [1, 1]} : vector<8x128xf32> to vector<8x32xf32>
    %28 = arith.mulf %21, %7 : vector<8x32xf32>
    %29 = arith.mulf %20, %26 : vector<8x32xf32>
    %30 = arith.addf %28, %29 : vector<8x32xf32>
    %31 = math.tanh %30 : vector<8x32xf32>
    %32 = arith.mulf %27, %31 : vector<8x32xf32>
    %33 = vector.extract_strided_slice %11 {offsets = [8, 0], sizes = [8, 128], strides = [1, 1]} : vector<64x128xf32> to vector<8x128xf32>
    %cst_12 = arith.constant dense<0.000000e+00> : vector<8x128xf32>
    %34 = tpu.matmul %32, %1, %cst_12 {dimension_numbers = #tpu.dot_dimension_numbers<[1], [0], [0], [1], [0, 0, 1, 1], [], []>} : vector<8x32xf32>, vector<32x128xf32>, vector<8x128xf32> -> vector<8x128xf32>
    %35 = arith.addf %33, %34 : vector<8x128xf32>
    %36 = arith.negf %35 : vector<8x128xf32>
    %37 = math.exp %36 : vector<8x128xf32>
    %cst_13 = arith.constant 1.000000e+00 : f32
    %38 = vector.broadcast %cst_13 : f32 to vector<8x128xf32>
    %39 = arith.addf %38, %37 : vector<8x128xf32>
    %40 = arith.divf %38, %39 : vector<8x128xf32>
    %41 = vector.extract_strided_slice %40 {offsets = [0, 0], sizes = [8, 32], strides = [1, 1]} : vector<8x128xf32> to vector<8x32xf32>
    %42 = vector.extract_strided_slice %40 {offsets = [0, 32], sizes = [8, 32], strides = [1, 1]} : vector<8x128xf32> to vector<8x32xf32>
    %43 = vector.extract_strided_slice %40 {offsets = [0, 64], sizes = [8, 32], strides = [1, 1]} : vector<8x128xf32> to vector<8x32xf32>
    %cst_14 = arith.constant 2.000000e+00 : f32
    %44 = vector.broadcast %cst_14 : f32 to vector<8x32xf32>
    %45 = arith.mulf %44, %43 : vector<8x32xf32>
    %cst_15 = arith.constant 1.000000e+00 : f32
    %46 = vector.broadcast %cst_15 : f32 to vector<8x32xf32>
    %47 = arith.subf %45, %46 : vector<8x32xf32>
    %48 = vector.extract_strided_slice %40 {offsets = [0, 96], sizes = [8, 32], strides = [1, 1]} : vector<8x128xf32> to vector<8x32xf32>
    %49 = arith.mulf %42, %30 : vector<8x32xf32>
    %50 = arith.mulf %41, %47 : vector<8x32xf32>
    %51 = arith.addf %49, %50 : vector<8x32xf32>
    %52 = math.tanh %51 : vector<8x32xf32>
    %53 = arith.mulf %48, %52 : vector<8x32xf32>
    %54 = vector.extract_strided_slice %11 {offsets = [16, 0], sizes = [8, 128], strides = [1, 1]} : vector<64x128xf32> to vector<8x128xf32>
    %cst_16 = arith.constant dense<0.000000e+00> : vector<8x128xf32>
    %55 = tpu.matmul %53, %1, %cst_16 {dimension_numbers = #tpu.dot_dimension_numbers<[1], [0], [0], [1], [0, 0, 1, 1], [], []>} : vector<8x32xf32>, vector<32x128xf32>, vector<8x128xf32> -> vector<8x128xf32>
    %56 = arith.addf %54, %55 : vector<8x128xf32>
    %57 = arith.negf %56 : vector<8x128xf32>
    %58 = math.exp %57 : vector<8x128xf32>
    %cst_17 = arith.constant 1.000000e+00 : f32
    %59 = vector.broadcast %cst_17 : f32 to vector<8x128xf32>
    %60 = arith.addf %59, %58 : vector<8x128xf32>
    %61 = arith.divf %59, %60 : vector<8x128xf32>
    %62 = vector.extract_strided_slice %61 {offsets = [0, 0], sizes = [8, 32], strides = [1, 1]} : vector<8x128xf32> to vector<8x32xf32>
    %63 = vector.extract_strided_slice %61 {offsets = [0, 32], sizes = [8, 32], strides = [1, 1]} : vector<8x128xf32> to vector<8x32xf32>
    %64 = vector.extract_strided_slice %61 {offsets = [0, 64], sizes = [8, 32], strides = [1, 1]} : vector<8x128xf32> to vector<8x32xf32>
    %cst_18 = arith.constant 2.000000e+00 : f32
    %65 = vector.broadcast %cst_18 : f32 to vector<8x32xf32>
    %66 = arith.mulf %65, %64 : vector<8x32xf32>
    %cst_19 = arith.constant 1.000000e+00 : f32
    %67 = vector.broadcast %cst_19 : f32 to vector<8x32xf32>
    %68 = arith.subf %66, %67 : vector<8x32xf32>
    %69 = vector.extract_strided_slice %61 {offsets = [0, 96], sizes = [8, 32], strides = [1, 1]} : vector<8x128xf32> to vector<8x32xf32>
    %70 = arith.mulf %63, %51 : vector<8x32xf32>
    %71 = arith.mulf %62, %68 : vector<8x32xf32>
    %72 = arith.addf %70, %71 : vector<8x32xf32>
    %73 = math.tanh %72 : vector<8x32xf32>
    %74 = arith.mulf %69, %73 : vector<8x32xf32>
    %75 = vector.extract_strided_slice %11 {offsets = [24, 0], sizes = [8, 128], strides = [1, 1]} : vector<64x128xf32> to vector<8x128xf32>
    %cst_20 = arith.constant dense<0.000000e+00> : vector<8x128xf32>
    %76 = tpu.matmul %74, %1, %cst_20 {dimension_numbers = #tpu.dot_dimension_numbers<[1], [0], [0], [1], [0, 0, 1, 1], [], []>} : vector<8x32xf32>, vector<32x128xf32>, vector<8x128xf32> -> vector<8x128xf32>
    %77 = arith.addf %75, %76 : vector<8x128xf32>
    %78 = arith.negf %77 : vector<8x128xf32>
    %79 = math.exp %78 : vector<8x128xf32>
    %cst_21 = arith.constant 1.000000e+00 : f32
    %80 = vector.broadcast %cst_21 : f32 to vector<8x128xf32>
    %81 = arith.addf %80, %79 : vector<8x128xf32>
    %82 = arith.divf %80, %81 : vector<8x128xf32>
    %83 = vector.extract_strided_slice %82 {offsets = [0, 0], sizes = [8, 32], strides = [1, 1]} : vector<8x128xf32> to vector<8x32xf32>
    %84 = vector.extract_strided_slice %82 {offsets = [0, 32], sizes = [8, 32], strides = [1, 1]} : vector<8x128xf32> to vector<8x32xf32>
    %85 = vector.extract_strided_slice %82 {offsets = [0, 64], sizes = [8, 32], strides = [1, 1]} : vector<8x128xf32> to vector<8x32xf32>
    %cst_22 = arith.constant 2.000000e+00 : f32
    %86 = vector.broadcast %cst_22 : f32 to vector<8x32xf32>
    %87 = arith.mulf %86, %85 : vector<8x32xf32>
    %cst_23 = arith.constant 1.000000e+00 : f32
    %88 = vector.broadcast %cst_23 : f32 to vector<8x32xf32>
    %89 = arith.subf %87, %88 : vector<8x32xf32>
    %90 = vector.extract_strided_slice %82 {offsets = [0, 96], sizes = [8, 32], strides = [1, 1]} : vector<8x128xf32> to vector<8x32xf32>
    %91 = arith.mulf %84, %72 : vector<8x32xf32>
    %92 = arith.mulf %83, %89 : vector<8x32xf32>
    %93 = arith.addf %91, %92 : vector<8x32xf32>
    %94 = math.tanh %93 : vector<8x32xf32>
    %95 = arith.mulf %90, %94 : vector<8x32xf32>
    %96 = vector.extract_strided_slice %11 {offsets = [32, 0], sizes = [8, 128], strides = [1, 1]} : vector<64x128xf32> to vector<8x128xf32>
    %cst_24 = arith.constant dense<0.000000e+00> : vector<8x128xf32>
    %97 = tpu.matmul %95, %1, %cst_24 {dimension_numbers = #tpu.dot_dimension_numbers<[1], [0], [0], [1], [0, 0, 1, 1], [], []>} : vector<8x32xf32>, vector<32x128xf32>, vector<8x128xf32> -> vector<8x128xf32>
    %98 = arith.addf %96, %97 : vector<8x128xf32>
    %99 = arith.negf %98 : vector<8x128xf32>
    %100 = math.exp %99 : vector<8x128xf32>
    %cst_25 = arith.constant 1.000000e+00 : f32
    %101 = vector.broadcast %cst_25 : f32 to vector<8x128xf32>
    %102 = arith.addf %101, %100 : vector<8x128xf32>
    %103 = arith.divf %101, %102 : vector<8x128xf32>
    %104 = vector.extract_strided_slice %103 {offsets = [0, 0], sizes = [8, 32], strides = [1, 1]} : vector<8x128xf32> to vector<8x32xf32>
    %105 = vector.extract_strided_slice %103 {offsets = [0, 32], sizes = [8, 32], strides = [1, 1]} : vector<8x128xf32> to vector<8x32xf32>
    %106 = vector.extract_strided_slice %103 {offsets = [0, 64], sizes = [8, 32], strides = [1, 1]} : vector<8x128xf32> to vector<8x32xf32>
    %cst_26 = arith.constant 2.000000e+00 : f32
    %107 = vector.broadcast %cst_26 : f32 to vector<8x32xf32>
    %108 = arith.mulf %107, %106 : vector<8x32xf32>
    %cst_27 = arith.constant 1.000000e+00 : f32
    %109 = vector.broadcast %cst_27 : f32 to vector<8x32xf32>
    %110 = arith.subf %108, %109 : vector<8x32xf32>
    %111 = vector.extract_strided_slice %103 {offsets = [0, 96], sizes = [8, 32], strides = [1, 1]} : vector<8x128xf32> to vector<8x32xf32>
    %112 = arith.mulf %105, %93 : vector<8x32xf32>
    %113 = arith.mulf %104, %110 : vector<8x32xf32>
    %114 = arith.addf %112, %113 : vector<8x32xf32>
    %115 = math.tanh %114 : vector<8x32xf32>
    %116 = arith.mulf %111, %115 : vector<8x32xf32>
    %117 = vector.extract_strided_slice %11 {offsets = [40, 0], sizes = [8, 128], strides = [1, 1]} : vector<64x128xf32> to vector<8x128xf32>
    %cst_28 = arith.constant dense<0.000000e+00> : vector<8x128xf32>
    %118 = tpu.matmul %116, %1, %cst_28 {dimension_numbers = #tpu.dot_dimension_numbers<[1], [0], [0], [1], [0, 0, 1, 1], [], []>} : vector<8x32xf32>, vector<32x128xf32>, vector<8x128xf32> -> vector<8x128xf32>
    %119 = arith.addf %117, %118 : vector<8x128xf32>
    %120 = arith.negf %119 : vector<8x128xf32>
    %121 = math.exp %120 : vector<8x128xf32>
    %cst_29 = arith.constant 1.000000e+00 : f32
    %122 = vector.broadcast %cst_29 : f32 to vector<8x128xf32>
    %123 = arith.addf %122, %121 : vector<8x128xf32>
    %124 = arith.divf %122, %123 : vector<8x128xf32>
    %125 = vector.extract_strided_slice %124 {offsets = [0, 0], sizes = [8, 32], strides = [1, 1]} : vector<8x128xf32> to vector<8x32xf32>
    %126 = vector.extract_strided_slice %124 {offsets = [0, 32], sizes = [8, 32], strides = [1, 1]} : vector<8x128xf32> to vector<8x32xf32>
    %127 = vector.extract_strided_slice %124 {offsets = [0, 64], sizes = [8, 32], strides = [1, 1]} : vector<8x128xf32> to vector<8x32xf32>
    %cst_30 = arith.constant 2.000000e+00 : f32
    %128 = vector.broadcast %cst_30 : f32 to vector<8x32xf32>
    %129 = arith.mulf %128, %127 : vector<8x32xf32>
    %cst_31 = arith.constant 1.000000e+00 : f32
    %130 = vector.broadcast %cst_31 : f32 to vector<8x32xf32>
    %131 = arith.subf %129, %130 : vector<8x32xf32>
    %132 = vector.extract_strided_slice %124 {offsets = [0, 96], sizes = [8, 32], strides = [1, 1]} : vector<8x128xf32> to vector<8x32xf32>
    %133 = arith.mulf %126, %114 : vector<8x32xf32>
    %134 = arith.mulf %125, %131 : vector<8x32xf32>
    %135 = arith.addf %133, %134 : vector<8x32xf32>
    %136 = math.tanh %135 : vector<8x32xf32>
    %137 = arith.mulf %132, %136 : vector<8x32xf32>
    %138 = vector.extract_strided_slice %11 {offsets = [48, 0], sizes = [8, 128], strides = [1, 1]} : vector<64x128xf32> to vector<8x128xf32>
    %cst_32 = arith.constant dense<0.000000e+00> : vector<8x128xf32>
    %139 = tpu.matmul %137, %1, %cst_32 {dimension_numbers = #tpu.dot_dimension_numbers<[1], [0], [0], [1], [0, 0, 1, 1], [], []>} : vector<8x32xf32>, vector<32x128xf32>, vector<8x128xf32> -> vector<8x128xf32>
    %140 = arith.addf %138, %139 : vector<8x128xf32>
    %141 = arith.negf %140 : vector<8x128xf32>
    %142 = math.exp %141 : vector<8x128xf32>
    %cst_33 = arith.constant 1.000000e+00 : f32
    %143 = vector.broadcast %cst_33 : f32 to vector<8x128xf32>
    %144 = arith.addf %143, %142 : vector<8x128xf32>
    %145 = arith.divf %143, %144 : vector<8x128xf32>
    %146 = vector.extract_strided_slice %145 {offsets = [0, 0], sizes = [8, 32], strides = [1, 1]} : vector<8x128xf32> to vector<8x32xf32>
    %147 = vector.extract_strided_slice %145 {offsets = [0, 32], sizes = [8, 32], strides = [1, 1]} : vector<8x128xf32> to vector<8x32xf32>
    %148 = vector.extract_strided_slice %145 {offsets = [0, 64], sizes = [8, 32], strides = [1, 1]} : vector<8x128xf32> to vector<8x32xf32>
    %cst_34 = arith.constant 2.000000e+00 : f32
    %149 = vector.broadcast %cst_34 : f32 to vector<8x32xf32>
    %150 = arith.mulf %149, %148 : vector<8x32xf32>
    %cst_35 = arith.constant 1.000000e+00 : f32
    %151 = vector.broadcast %cst_35 : f32 to vector<8x32xf32>
    %152 = arith.subf %150, %151 : vector<8x32xf32>
    %153 = vector.extract_strided_slice %145 {offsets = [0, 96], sizes = [8, 32], strides = [1, 1]} : vector<8x128xf32> to vector<8x32xf32>
    %154 = arith.mulf %147, %135 : vector<8x32xf32>
    %155 = arith.mulf %146, %152 : vector<8x32xf32>
    %156 = arith.addf %154, %155 : vector<8x32xf32>
    %157 = math.tanh %156 : vector<8x32xf32>
    %158 = arith.mulf %153, %157 : vector<8x32xf32>
    %159 = vector.extract_strided_slice %11 {offsets = [56, 0], sizes = [8, 128], strides = [1, 1]} : vector<64x128xf32> to vector<8x128xf32>
    %cst_36 = arith.constant dense<0.000000e+00> : vector<8x128xf32>
    %160 = tpu.matmul %158, %1, %cst_36 {dimension_numbers = #tpu.dot_dimension_numbers<[1], [0], [0], [1], [0, 0, 1, 1], [], []>} : vector<8x32xf32>, vector<32x128xf32>, vector<8x128xf32> -> vector<8x128xf32>
    %161 = arith.addf %159, %160 : vector<8x128xf32>
    %162 = arith.negf %161 : vector<8x128xf32>
    %163 = math.exp %162 : vector<8x128xf32>
    %cst_37 = arith.constant 1.000000e+00 : f32
    %164 = vector.broadcast %cst_37 : f32 to vector<8x128xf32>
    %165 = arith.addf %164, %163 : vector<8x128xf32>
    %166 = arith.divf %164, %165 : vector<8x128xf32>
    %167 = vector.extract_strided_slice %166 {offsets = [0, 0], sizes = [8, 32], strides = [1, 1]} : vector<8x128xf32> to vector<8x32xf32>
    %168 = vector.extract_strided_slice %166 {offsets = [0, 32], sizes = [8, 32], strides = [1, 1]} : vector<8x128xf32> to vector<8x32xf32>
    %169 = vector.extract_strided_slice %166 {offsets = [0, 64], sizes = [8, 32], strides = [1, 1]} : vector<8x128xf32> to vector<8x32xf32>
    %cst_38 = arith.constant 2.000000e+00 : f32
    %170 = vector.broadcast %cst_38 : f32 to vector<8x32xf32>
    %171 = arith.mulf %170, %169 : vector<8x32xf32>
    %cst_39 = arith.constant 1.000000e+00 : f32
    %172 = vector.broadcast %cst_39 : f32 to vector<8x32xf32>
    %173 = arith.subf %171, %172 : vector<8x32xf32>
    %174 = vector.extract_strided_slice %166 {offsets = [0, 96], sizes = [8, 32], strides = [1, 1]} : vector<8x128xf32> to vector<8x32xf32>
    %175 = arith.mulf %168, %156 : vector<8x32xf32>
    %176 = arith.mulf %167, %173 : vector<8x32xf32>
    %177 = arith.addf %175, %176 : vector<8x32xf32>
    %178 = math.tanh %177 : vector<8x32xf32>
    %179 = arith.mulf %174, %178 : vector<8x32xf32>
    %180 = tpu.concatenate %32, %53, %74, %95, %116, %137, %158, %179 in 0 : vector<8x32xf32>, vector<8x32xf32>, vector<8x32xf32>, vector<8x32xf32>, vector<8x32xf32>, vector<8x32xf32>, vector<8x32xf32>, vector<8x32xf32> -> vector<64x32xf32>
    %cst_40 = arith.constant dense<0.000000e+00> : vector<64x128xf32>
    %181 = tpu.matmul %180, %2, %cst_40 {dimension_numbers = #tpu.dot_dimension_numbers<[1], [0], [0], [1], [0, 0, 1, 1], [], []>} : vector<64x32xf32>, vector<32x128xf32>, vector<64x128xf32> -> vector<64x128xf32>
    %182 = vector.broadcast %6 : vector<1x128xf32> to vector<64x128xf32>
    %183 = arith.addf %181, %182 : vector<64x128xf32>
    %184 = vector.extract_strided_slice %183 {offsets = [0, 0], sizes = [8, 128], strides = [1, 1]} : vector<64x128xf32> to vector<8x128xf32>
    %cst_41 = arith.constant dense<0.000000e+00> : vector<8x128xf32>
    %185 = tpu.matmul %7, %3, %cst_41 {dimension_numbers = #tpu.dot_dimension_numbers<[1], [0], [0], [1], [0, 0, 1, 1], [], []>} : vector<8x32xf32>, vector<32x128xf32>, vector<8x128xf32> -> vector<8x128xf32>
    %186 = arith.addf %184, %185 : vector<8x128xf32>
    %187 = arith.negf %186 : vector<8x128xf32>
    %188 = math.exp %187 : vector<8x128xf32>
    %cst_42 = arith.constant 1.000000e+00 : f32
    %189 = vector.broadcast %cst_42 : f32 to vector<8x128xf32>
    %190 = arith.addf %189, %188 : vector<8x128xf32>
    %191 = arith.divf %189, %190 : vector<8x128xf32>
    %192 = vector.extract_strided_slice %191 {offsets = [0, 0], sizes = [8, 32], strides = [1, 1]} : vector<8x128xf32> to vector<8x32xf32>
    %193 = vector.extract_strided_slice %191 {offsets = [0, 32], sizes = [8, 32], strides = [1, 1]} : vector<8x128xf32> to vector<8x32xf32>
    %194 = vector.extract_strided_slice %191 {offsets = [0, 64], sizes = [8, 32], strides = [1, 1]} : vector<8x128xf32> to vector<8x32xf32>
    %cst_43 = arith.constant 2.000000e+00 : f32
    %195 = vector.broadcast %cst_43 : f32 to vector<8x32xf32>
    %196 = arith.mulf %195, %194 : vector<8x32xf32>
    %cst_44 = arith.constant 1.000000e+00 : f32
    %197 = vector.broadcast %cst_44 : f32 to vector<8x32xf32>
    %198 = arith.subf %196, %197 : vector<8x32xf32>
    %199 = vector.extract_strided_slice %191 {offsets = [0, 96], sizes = [8, 32], strides = [1, 1]} : vector<8x128xf32> to vector<8x32xf32>
    %200 = arith.mulf %193, %7 : vector<8x32xf32>
    %201 = arith.mulf %192, %198 : vector<8x32xf32>
    %202 = arith.addf %200, %201 : vector<8x32xf32>
    %203 = math.tanh %202 : vector<8x32xf32>
    %204 = arith.mulf %199, %203 : vector<8x32xf32>
    %205 = vector.extract_strided_slice %183 {offsets = [8, 0], sizes = [8, 128], strides = [1, 1]} : vector<64x128xf32> to vector<8x128xf32>
    %cst_45 = arith.constant dense<0.000000e+00> : vector<8x128xf32>
    %206 = tpu.matmul %204, %3, %cst_45 {dimension_numbers = #tpu.dot_dimension_numbers<[1], [0], [0], [1], [0, 0, 1, 1], [], []>} : vector<8x32xf32>, vector<32x128xf32>, vector<8x128xf32> -> vector<8x128xf32>
    %207 = arith.addf %205, %206 : vector<8x128xf32>
    %208 = arith.negf %207 : vector<8x128xf32>
    %209 = math.exp %208 : vector<8x128xf32>
    %cst_46 = arith.constant 1.000000e+00 : f32
    %210 = vector.broadcast %cst_46 : f32 to vector<8x128xf32>
    %211 = arith.addf %210, %209 : vector<8x128xf32>
    %212 = arith.divf %210, %211 : vector<8x128xf32>
    %213 = vector.extract_strided_slice %212 {offsets = [0, 0], sizes = [8, 32], strides = [1, 1]} : vector<8x128xf32> to vector<8x32xf32>
    %214 = vector.extract_strided_slice %212 {offsets = [0, 32], sizes = [8, 32], strides = [1, 1]} : vector<8x128xf32> to vector<8x32xf32>
    %215 = vector.extract_strided_slice %212 {offsets = [0, 64], sizes = [8, 32], strides = [1, 1]} : vector<8x128xf32> to vector<8x32xf32>
    %cst_47 = arith.constant 2.000000e+00 : f32
    %216 = vector.broadcast %cst_47 : f32 to vector<8x32xf32>
    %217 = arith.mulf %216, %215 : vector<8x32xf32>
    %cst_48 = arith.constant 1.000000e+00 : f32
    %218 = vector.broadcast %cst_48 : f32 to vector<8x32xf32>
    %219 = arith.subf %217, %218 : vector<8x32xf32>
    %220 = vector.extract_strided_slice %212 {offsets = [0, 96], sizes = [8, 32], strides = [1, 1]} : vector<8x128xf32> to vector<8x32xf32>
    %221 = arith.mulf %214, %202 : vector<8x32xf32>
    %222 = arith.mulf %213, %219 : vector<8x32xf32>
    %223 = arith.addf %221, %222 : vector<8x32xf32>
    %224 = math.tanh %223 : vector<8x32xf32>
    %225 = arith.mulf %220, %224 : vector<8x32xf32>
    %226 = vector.extract_strided_slice %183 {offsets = [16, 0], sizes = [8, 128], strides = [1, 1]} : vector<64x128xf32> to vector<8x128xf32>
    %cst_49 = arith.constant dense<0.000000e+00> : vector<8x128xf32>
    %227 = tpu.matmul %225, %3, %cst_49 {dimension_numbers = #tpu.dot_dimension_numbers<[1], [0], [0], [1], [0, 0, 1, 1], [], []>} : vector<8x32xf32>, vector<32x128xf32>, vector<8x128xf32> -> vector<8x128xf32>
    %228 = arith.addf %226, %227 : vector<8x128xf32>
    %229 = arith.negf %228 : vector<8x128xf32>
    %230 = math.exp %229 : vector<8x128xf32>
    %cst_50 = arith.constant 1.000000e+00 : f32
    %231 = vector.broadcast %cst_50 : f32 to vector<8x128xf32>
    %232 = arith.addf %231, %230 : vector<8x128xf32>
    %233 = arith.divf %231, %232 : vector<8x128xf32>
    %234 = vector.extract_strided_slice %233 {offsets = [0, 0], sizes = [8, 32], strides = [1, 1]} : vector<8x128xf32> to vector<8x32xf32>
    %235 = vector.extract_strided_slice %233 {offsets = [0, 32], sizes = [8, 32], strides = [1, 1]} : vector<8x128xf32> to vector<8x32xf32>
    %236 = vector.extract_strided_slice %233 {offsets = [0, 64], sizes = [8, 32], strides = [1, 1]} : vector<8x128xf32> to vector<8x32xf32>
    %cst_51 = arith.constant 2.000000e+00 : f32
    %237 = vector.broadcast %cst_51 : f32 to vector<8x32xf32>
    %238 = arith.mulf %237, %236 : vector<8x32xf32>
    %cst_52 = arith.constant 1.000000e+00 : f32
    %239 = vector.broadcast %cst_52 : f32 to vector<8x32xf32>
    %240 = arith.subf %238, %239 : vector<8x32xf32>
    %241 = vector.extract_strided_slice %233 {offsets = [0, 96], sizes = [8, 32], strides = [1, 1]} : vector<8x128xf32> to vector<8x32xf32>
    %242 = arith.mulf %235, %223 : vector<8x32xf32>
    %243 = arith.mulf %234, %240 : vector<8x32xf32>
    %244 = arith.addf %242, %243 : vector<8x32xf32>
    %245 = math.tanh %244 : vector<8x32xf32>
    %246 = arith.mulf %241, %245 : vector<8x32xf32>
    %247 = vector.extract_strided_slice %183 {offsets = [24, 0], sizes = [8, 128], strides = [1, 1]} : vector<64x128xf32> to vector<8x128xf32>
    %cst_53 = arith.constant dense<0.000000e+00> : vector<8x128xf32>
    %248 = tpu.matmul %246, %3, %cst_53 {dimension_numbers = #tpu.dot_dimension_numbers<[1], [0], [0], [1], [0, 0, 1, 1], [], []>} : vector<8x32xf32>, vector<32x128xf32>, vector<8x128xf32> -> vector<8x128xf32>
    %249 = arith.addf %247, %248 : vector<8x128xf32>
    %250 = arith.negf %249 : vector<8x128xf32>
    %251 = math.exp %250 : vector<8x128xf32>
    %cst_54 = arith.constant 1.000000e+00 : f32
    %252 = vector.broadcast %cst_54 : f32 to vector<8x128xf32>
    %253 = arith.addf %252, %251 : vector<8x128xf32>
    %254 = arith.divf %252, %253 : vector<8x128xf32>
    %255 = vector.extract_strided_slice %254 {offsets = [0, 0], sizes = [8, 32], strides = [1, 1]} : vector<8x128xf32> to vector<8x32xf32>
    %256 = vector.extract_strided_slice %254 {offsets = [0, 32], sizes = [8, 32], strides = [1, 1]} : vector<8x128xf32> to vector<8x32xf32>
    %257 = vector.extract_strided_slice %254 {offsets = [0, 64], sizes = [8, 32], strides = [1, 1]} : vector<8x128xf32> to vector<8x32xf32>
    %cst_55 = arith.constant 2.000000e+00 : f32
    %258 = vector.broadcast %cst_55 : f32 to vector<8x32xf32>
    %259 = arith.mulf %258, %257 : vector<8x32xf32>
    %cst_56 = arith.constant 1.000000e+00 : f32
    %260 = vector.broadcast %cst_56 : f32 to vector<8x32xf32>
    %261 = arith.subf %259, %260 : vector<8x32xf32>
    %262 = vector.extract_strided_slice %254 {offsets = [0, 96], sizes = [8, 32], strides = [1, 1]} : vector<8x128xf32> to vector<8x32xf32>
    %263 = arith.mulf %256, %244 : vector<8x32xf32>
    %264 = arith.mulf %255, %261 : vector<8x32xf32>
    %265 = arith.addf %263, %264 : vector<8x32xf32>
    %266 = math.tanh %265 : vector<8x32xf32>
    %267 = arith.mulf %262, %266 : vector<8x32xf32>
    %268 = vector.extract_strided_slice %183 {offsets = [32, 0], sizes = [8, 128], strides = [1, 1]} : vector<64x128xf32> to vector<8x128xf32>
    %cst_57 = arith.constant dense<0.000000e+00> : vector<8x128xf32>
    %269 = tpu.matmul %267, %3, %cst_57 {dimension_numbers = #tpu.dot_dimension_numbers<[1], [0], [0], [1], [0, 0, 1, 1], [], []>} : vector<8x32xf32>, vector<32x128xf32>, vector<8x128xf32> -> vector<8x128xf32>
    %270 = arith.addf %268, %269 : vector<8x128xf32>
    %271 = arith.negf %270 : vector<8x128xf32>
    %272 = math.exp %271 : vector<8x128xf32>
    %cst_58 = arith.constant 1.000000e+00 : f32
    %273 = vector.broadcast %cst_58 : f32 to vector<8x128xf32>
    %274 = arith.addf %273, %272 : vector<8x128xf32>
    %275 = arith.divf %273, %274 : vector<8x128xf32>
    %276 = vector.extract_strided_slice %275 {offsets = [0, 0], sizes = [8, 32], strides = [1, 1]} : vector<8x128xf32> to vector<8x32xf32>
    %277 = vector.extract_strided_slice %275 {offsets = [0, 32], sizes = [8, 32], strides = [1, 1]} : vector<8x128xf32> to vector<8x32xf32>
    %278 = vector.extract_strided_slice %275 {offsets = [0, 64], sizes = [8, 32], strides = [1, 1]} : vector<8x128xf32> to vector<8x32xf32>
    %cst_59 = arith.constant 2.000000e+00 : f32
    %279 = vector.broadcast %cst_59 : f32 to vector<8x32xf32>
    %280 = arith.mulf %279, %278 : vector<8x32xf32>
    %cst_60 = arith.constant 1.000000e+00 : f32
    %281 = vector.broadcast %cst_60 : f32 to vector<8x32xf32>
    %282 = arith.subf %280, %281 : vector<8x32xf32>
    %283 = vector.extract_strided_slice %275 {offsets = [0, 96], sizes = [8, 32], strides = [1, 1]} : vector<8x128xf32> to vector<8x32xf32>
    %284 = arith.mulf %277, %265 : vector<8x32xf32>
    %285 = arith.mulf %276, %282 : vector<8x32xf32>
    %286 = arith.addf %284, %285 : vector<8x32xf32>
    %287 = math.tanh %286 : vector<8x32xf32>
    %288 = arith.mulf %283, %287 : vector<8x32xf32>
    %289 = vector.extract_strided_slice %183 {offsets = [40, 0], sizes = [8, 128], strides = [1, 1]} : vector<64x128xf32> to vector<8x128xf32>
    %cst_61 = arith.constant dense<0.000000e+00> : vector<8x128xf32>
    %290 = tpu.matmul %288, %3, %cst_61 {dimension_numbers = #tpu.dot_dimension_numbers<[1], [0], [0], [1], [0, 0, 1, 1], [], []>} : vector<8x32xf32>, vector<32x128xf32>, vector<8x128xf32> -> vector<8x128xf32>
    %291 = arith.addf %289, %290 : vector<8x128xf32>
    %292 = arith.negf %291 : vector<8x128xf32>
    %293 = math.exp %292 : vector<8x128xf32>
    %cst_62 = arith.constant 1.000000e+00 : f32
    %294 = vector.broadcast %cst_62 : f32 to vector<8x128xf32>
    %295 = arith.addf %294, %293 : vector<8x128xf32>
    %296 = arith.divf %294, %295 : vector<8x128xf32>
    %297 = vector.extract_strided_slice %296 {offsets = [0, 0], sizes = [8, 32], strides = [1, 1]} : vector<8x128xf32> to vector<8x32xf32>
    %298 = vector.extract_strided_slice %296 {offsets = [0, 32], sizes = [8, 32], strides = [1, 1]} : vector<8x128xf32> to vector<8x32xf32>
    %299 = vector.extract_strided_slice %296 {offsets = [0, 64], sizes = [8, 32], strides = [1, 1]} : vector<8x128xf32> to vector<8x32xf32>
    %cst_63 = arith.constant 2.000000e+00 : f32
    %300 = vector.broadcast %cst_63 : f32 to vector<8x32xf32>
    %301 = arith.mulf %300, %299 : vector<8x32xf32>
    %cst_64 = arith.constant 1.000000e+00 : f32
    %302 = vector.broadcast %cst_64 : f32 to vector<8x32xf32>
    %303 = arith.subf %301, %302 : vector<8x32xf32>
    %304 = vector.extract_strided_slice %296 {offsets = [0, 96], sizes = [8, 32], strides = [1, 1]} : vector<8x128xf32> to vector<8x32xf32>
    %305 = arith.mulf %298, %286 : vector<8x32xf32>
    %306 = arith.mulf %297, %303 : vector<8x32xf32>
    %307 = arith.addf %305, %306 : vector<8x32xf32>
    %308 = math.tanh %307 : vector<8x32xf32>
    %309 = arith.mulf %304, %308 : vector<8x32xf32>
    %310 = vector.extract_strided_slice %183 {offsets = [48, 0], sizes = [8, 128], strides = [1, 1]} : vector<64x128xf32> to vector<8x128xf32>
    %cst_65 = arith.constant dense<0.000000e+00> : vector<8x128xf32>
    %311 = tpu.matmul %309, %3, %cst_65 {dimension_numbers = #tpu.dot_dimension_numbers<[1], [0], [0], [1], [0, 0, 1, 1], [], []>} : vector<8x32xf32>, vector<32x128xf32>, vector<8x128xf32> -> vector<8x128xf32>
    %312 = arith.addf %310, %311 : vector<8x128xf32>
    %313 = arith.negf %312 : vector<8x128xf32>
    %314 = math.exp %313 : vector<8x128xf32>
    %cst_66 = arith.constant 1.000000e+00 : f32
    %315 = vector.broadcast %cst_66 : f32 to vector<8x128xf32>
    %316 = arith.addf %315, %314 : vector<8x128xf32>
    %317 = arith.divf %315, %316 : vector<8x128xf32>
    %318 = vector.extract_strided_slice %317 {offsets = [0, 0], sizes = [8, 32], strides = [1, 1]} : vector<8x128xf32> to vector<8x32xf32>
    %319 = vector.extract_strided_slice %317 {offsets = [0, 32], sizes = [8, 32], strides = [1, 1]} : vector<8x128xf32> to vector<8x32xf32>
    %320 = vector.extract_strided_slice %317 {offsets = [0, 64], sizes = [8, 32], strides = [1, 1]} : vector<8x128xf32> to vector<8x32xf32>
    %cst_67 = arith.constant 2.000000e+00 : f32
    %321 = vector.broadcast %cst_67 : f32 to vector<8x32xf32>
    %322 = arith.mulf %321, %320 : vector<8x32xf32>
    %cst_68 = arith.constant 1.000000e+00 : f32
    %323 = vector.broadcast %cst_68 : f32 to vector<8x32xf32>
    %324 = arith.subf %322, %323 : vector<8x32xf32>
    %325 = vector.extract_strided_slice %317 {offsets = [0, 96], sizes = [8, 32], strides = [1, 1]} : vector<8x128xf32> to vector<8x32xf32>
    %326 = arith.mulf %319, %307 : vector<8x32xf32>
    %327 = arith.mulf %318, %324 : vector<8x32xf32>
    %328 = arith.addf %326, %327 : vector<8x32xf32>
    %329 = math.tanh %328 : vector<8x32xf32>
    %330 = arith.mulf %325, %329 : vector<8x32xf32>
    %331 = vector.extract_strided_slice %183 {offsets = [56, 0], sizes = [8, 128], strides = [1, 1]} : vector<64x128xf32> to vector<8x128xf32>
    %cst_69 = arith.constant dense<0.000000e+00> : vector<8x128xf32>
    %332 = tpu.matmul %330, %3, %cst_69 {dimension_numbers = #tpu.dot_dimension_numbers<[1], [0], [0], [1], [0, 0, 1, 1], [], []>} : vector<8x32xf32>, vector<32x128xf32>, vector<8x128xf32> -> vector<8x128xf32>
    %333 = arith.addf %331, %332 : vector<8x128xf32>
    %334 = arith.negf %333 : vector<8x128xf32>
    %335 = math.exp %334 : vector<8x128xf32>
    %cst_70 = arith.constant 1.000000e+00 : f32
    %336 = vector.broadcast %cst_70 : f32 to vector<8x128xf32>
    %337 = arith.addf %336, %335 : vector<8x128xf32>
    %338 = arith.divf %336, %337 : vector<8x128xf32>
    %339 = vector.extract_strided_slice %338 {offsets = [0, 0], sizes = [8, 32], strides = [1, 1]} : vector<8x128xf32> to vector<8x32xf32>
    %340 = vector.extract_strided_slice %338 {offsets = [0, 32], sizes = [8, 32], strides = [1, 1]} : vector<8x128xf32> to vector<8x32xf32>
    %341 = vector.extract_strided_slice %338 {offsets = [0, 64], sizes = [8, 32], strides = [1, 1]} : vector<8x128xf32> to vector<8x32xf32>
    %cst_71 = arith.constant 2.000000e+00 : f32
    %342 = vector.broadcast %cst_71 : f32 to vector<8x32xf32>
    %343 = arith.mulf %342, %341 : vector<8x32xf32>
    %cst_72 = arith.constant 1.000000e+00 : f32
    %344 = vector.broadcast %cst_72 : f32 to vector<8x32xf32>
    %345 = arith.subf %343, %344 : vector<8x32xf32>
    %346 = vector.extract_strided_slice %338 {offsets = [0, 96], sizes = [8, 32], strides = [1, 1]} : vector<8x128xf32> to vector<8x32xf32>
    %347 = arith.mulf %340, %328 : vector<8x32xf32>
    %348 = arith.mulf %339, %345 : vector<8x32xf32>
    %349 = arith.addf %347, %348 : vector<8x32xf32>
    %350 = math.tanh %349 : vector<8x32xf32>
    %351 = arith.mulf %346, %350 : vector<8x32xf32>
    %c120 = arith.constant 120 : index
    %c0_73 = arith.constant 0 : index
    %352 = vector.load %arg3[%c120, %c0_73] : memref<232x128xf32, #tpu.memory_space<vmem>>, vector<32x128xf32>
    %c152 = arith.constant 152 : index
    %c0_74 = arith.constant 0 : index
    %353 = vector.load %arg3[%c152, %c0_74] : memref<232x128xf32, #tpu.memory_space<vmem>>, vector<8x128xf32>
    %c160 = arith.constant 160 : index
    %c0_75 = arith.constant 0 : index
    %354 = vector.load %arg3[%c160, %c0_75] : memref<232x128xf32, #tpu.memory_space<vmem>>, vector<32x128xf32>
    %c192 = arith.constant 192 : index
    %c0_76 = arith.constant 0 : index
    %355 = vector.load %arg3[%c192, %c0_76] : memref<232x128xf32, #tpu.memory_space<vmem>>, vector<32x128xf32>
    %c224 = arith.constant 224 : index
    %c0_77 = arith.constant 0 : index
    %356 = vector.load %arg3[%c224, %c0_77] : memref<232x128xf32, #tpu.memory_space<vmem>>, vector<8x128xf32>
    %357 = vector.extract_strided_slice %356 {offsets = [0, 0], sizes = [1, 128], strides = [1, 1]} : vector<8x128xf32> to vector<1x128xf32>
    %358 = vector.extract_strided_slice %356 {offsets = [1, 0], sizes = [1, 128], strides = [1, 1]} : vector<8x128xf32> to vector<1x128xf32>
    %359 = vector.extract_strided_slice %356 {offsets = [2, 0], sizes = [1, 128], strides = [1, 1]} : vector<8x128xf32> to vector<1x128xf32>
    %cst_78 = arith.constant dense<0.000000e+00> : vector<8x128xf32>
    %360 = tpu.matmul %351, %352, %cst_78 {dimension_numbers = #tpu.dot_dimension_numbers<[1], [0], [0], [1], [0, 0, 1, 1], [], []>} : vector<8x32xf32>, vector<32x128xf32>, vector<8x128xf32> -> vector<8x128xf32>
    %c0_79 = arith.constant 0 : index
    %c0_80 = arith.constant 0 : index
    %361 = vector.load %arg2[%c0_79, %c0_80] : memref<8x8xf32, #tpu.memory_space<vmem>>, vector<8x8xf32>
    %cst_81 = arith.constant dense<0.000000e+00> : vector<8x128xf32>
    %362 = tpu.matmul %361, %353, %cst_81 {dimension_numbers = #tpu.dot_dimension_numbers<[1], [0], [0], [1], [0, 0, 1, 1], [], []>} : vector<8x8xf32>, vector<8x128xf32>, vector<8x128xf32> -> vector<8x128xf32>
    %363 = arith.addf %360, %362 : vector<8x128xf32>
    %364 = vector.broadcast %357 : vector<1x128xf32> to vector<8x128xf32>
    %365 = arith.addf %363, %364 : vector<8x128xf32>
    %366 = vector.extract_strided_slice %365 {offsets = [0, 0], sizes = [8, 32], strides = [1, 1]} : vector<8x128xf32> to vector<8x32xf32>
    %cst_82 = arith.constant 0.000000e+00 : f32
    %367 = vector.broadcast %cst_82 : f32 to vector<8x32xf32>
    %368 = arith.maximumf %366, %367 : vector<8x32xf32>
    %cst_83 = arith.constant dense<0.000000e+00> : vector<8x128xf32>
    %369 = tpu.matmul %368, %354, %cst_83 {dimension_numbers = #tpu.dot_dimension_numbers<[1], [0], [0], [1], [0, 0, 1, 1], [], []>} : vector<8x32xf32>, vector<32x128xf32>, vector<8x128xf32> -> vector<8x128xf32>
    %370 = vector.broadcast %358 : vector<1x128xf32> to vector<8x128xf32>
    %371 = arith.addf %369, %370 : vector<8x128xf32>
    %372 = vector.extract_strided_slice %371 {offsets = [0, 0], sizes = [8, 32], strides = [1, 1]} : vector<8x128xf32> to vector<8x32xf32>
    %cst_84 = arith.constant 0.000000e+00 : f32
    %373 = vector.broadcast %cst_84 : f32 to vector<8x32xf32>
    %374 = arith.maximumf %372, %373 : vector<8x32xf32>
    %cst_85 = arith.constant dense<0.000000e+00> : vector<8x128xf32>
    %375 = tpu.matmul %374, %355, %cst_85 {dimension_numbers = #tpu.dot_dimension_numbers<[1], [0], [0], [1], [0, 0, 1, 1], [], []>} : vector<8x32xf32>, vector<32x128xf32>, vector<8x128xf32> -> vector<8x128xf32>
    %376 = vector.broadcast %359 : vector<1x128xf32> to vector<8x128xf32>
    %377 = arith.addf %375, %376 : vector<8x128xf32>
    %378 = vector.extract_strided_slice %377 {offsets = [0, 0], sizes = [8, 1], strides = [1, 1]} : vector<8x128xf32> to vector<8x1xf32>
    %c0_86 = arith.constant 0 : index
    %c0_87 = arith.constant 0 : index
    %379 = vector.load %arg4[%c0_86, %c0_87] : memref<8x1xf32, #tpu.memory_space<vmem>>, vector<8x1xf32>
    tpu.vector_store %arg4[%c0_86, %c0_87], %378 {strides = array<i32>} : memref<8x1xf32, #tpu.memory_space<vmem>>, vector<8x1xf32>,
    return
  }
  func.func @transform_0(%arg0: i32) -> (i32, i32) {
    %c0_i32 = arith.constant 0 : i32
    %c0_i32_0 = arith.constant 0 : i32
    %c0_i32_1 = arith.constant 0 : i32
    return %c0_i32, %c0_i32_0 : i32, i32
  }
  func.func @transform_1(%arg0: i32) -> (i32, i32) {
    %c0_i32 = arith.constant 0 : i32
    %c0_i32_0 = arith.constant 0 : i32
    %c0_i32_1 = arith.constant 0 : i32
    return %c0_i32, %c0_i32_0 : i32, i32
  }
  func.func @transform_2(%arg0: i32) -> (i32, i32) {
    %c0_i32 = arith.constant 0 : i32
    %c0_i32_0 = arith.constant 0 : i32
    %c0_i32_1 = arith.constant 0 : i32
    return %c0_i32, %c0_i32_0 : i32, i32
  }
  func.func @transform_3(%arg0: i32) -> (i32, i32) {
    %c0_i32 = arith.constant 0 : i32
    %c0_i32_0 = arith.constant 0 : i32
    %c0_i32_1 = arith.constant 0 : i32
    return %c0_i32, %c0_i32_0 : i32, i32
  }
}

</mosaic_0001>

<llo_original>
// kernel: multi_lstm_forward.1
$region0: #{multi_lstm_forward.1}
  #allocation0 [shape = 'u32[]', space=smem, size = 0x4, offset = 0x4, fixed_abs, tag = 'smem constant byte address 0x4 - core index']
  #allocation1 [shape = 'u32[72,128]{1,0:T(1,128)}', space=vmem, size = 0x9000, scoped, tag = 'internal scratch']
  %s0 = inlined_call_operand.vmem [shape: f32[64,16], index: 0, kind: input, shape index: {}]
  %s1 = inlined_call_operand.vmem [shape: f32[8,8], index: 1, kind: input, shape index: {}]
  %s2 = inlined_call_operand.vmem [shape: f32[232,128], index: 2, kind: input, shape index: {}]
  %s3 = inlined_call_operand.vmem [shape: f32[8,1], index: 3, kind: output, shape index: {}]
  %s4 = sld [smem:[#allocation0]]
  $region22: #{multi_lstm_forward.1} parent=0
    _
  %s6 = ssub.s32 1, %s4
  %s7 = scalar_select 0, %s6, %s4
  // Predicated region
  $region2: #{multi_lstm_forward.1} parent=0 // pred_check
    _
  $region3: #{multi_lstm_forward.1} parent=0 // pred_check_branch
    %9 = sbr.rel (0) target = $region5
  $region4: #{multi_lstm_forward.1} parent=0 // pred_region
    _
  $region5: #{multi_lstm_forward.1} parent=0 // pred_fallthru
    _
  // Predicated region
  $region6: #{multi_lstm_forward.1} parent=0 // pred_check
    _
  $region7: #{multi_lstm_forward.1} parent=0 // pred_check_branch
    %11 = sbr.rel (0) target = $region9
  $region8: #{multi_lstm_forward.1} parent=0 // pred_region
    _
  $region9: #{multi_lstm_forward.1} parent=0 // pred_fallthru
    _
  // Predicated region
  $region10: #{multi_lstm_forward.1} parent=0 // pred_check
    _
  $region11: #{multi_lstm_forward.1} parent=0 // pred_check_branch
    %13 = sbr.rel (0) target = $region13
  $region12: #{multi_lstm_forward.1} parent=0 // pred_region
    _
  $region13: #{multi_lstm_forward.1} parent=0 // pred_fallthru
    _
  %v14 = vld [vmem:[%s2] sm:$0xff]
  %v15 = vld [vmem:[%s2 + $0x8] sm:$0xff]
  %v16 = vld [vmem:[%s2 + $0x10] sm:$0xff]
  %v17 = vld [vmem:[%s2 + $0x18] sm:$0xff]
  %v18 = vld [vmem:[%s2 + $0x20] sm:$0xff]
  %v19 = vld [vmem:[%s2 + $0x28] sm:$0xff]
  %v20 = vld [vmem:[%s2 + $0x30] sm:$0xff]
  %v21 = vld [vmem:[%s2 + $0x38] sm:$0xff]
  %v22 = vld [vmem:[%s2 + $0x40] sm:$0xff]
  %v23 = vld [vmem:[%s2 + $0x48] sm:$0xff]
  %v24 = vld [vmem:[%s2 + $0x50] sm:$0xff]
  %v25 = vld [vmem:[%s2 + $0x58] sm:$0xff]
  %v26 = vld [vmem:[%s2 + $0x60] sm:$0xff]
  %v27 = vld [vmem:[%s2 + $0x68] sm:$0xff]
  %v28 = vld [vmem:[%s2 + $0x70] sm:$0xff]
  %v29 = vld [vmem:[%s0] sm:$0xff]
  %v30 = vld [vmem:[%s0 + $0x8] sm:$0xff]
  %v31 = vld [vmem:[%s0 + $0x10] sm:$0xff]
  %v32 = vld [vmem:[%s0 + $0x18] sm:$0xff]
  %v33 = vld [vmem:[%s0 + $0x20] sm:$0xff]
  %v34 = vld [vmem:[%s0 + $0x28] sm:$0xff]
  %v35 = vld [vmem:[%s0 + $0x30] sm:$0xff]
  %v36 = vld [vmem:[%s0 + $0x38] sm:$0xff]
  %v37 = vperm.slane %v28, 0
  %vm38 = vcmask 130048
  %v40 = vsel %vm38, %v29, 0
  %v43 = vsel %vm38, %v30, 0
  %v46 = vsel %vm38, %v31, 0
  %v49 = vsel %vm38, %v32, 0
  %v52 = vsel %vm38, %v33, 0
  %v55 = vsel %vm38, %v34, 0
  %v58 = vsel %vm38, %v35, 0
  %v61 = vsel %vm38, %v36, 0
  %63 = vmatpush.msra.mxu0 0.0
  %64 = vmatpush.msra.mxu0 0.0
  %65 = vmatpush.msra.mxu0 0.0
  %66 = vmatpush.msra.mxu0 0.0
  %67 = vmatpush.msra.mxu0 0.0
  %68 = vmatpush.msra.mxu0 0.0
  %69 = vmatpush.msra.mxu0 0.0
  %70 = vmatpush.msra.mxu0 0.0
  %71 = vmatpush.msra.mxu0 0.0
  %72 = vmatpush.msra.mxu0 0.0
  %73 = vmatpush.msra.mxu0 0.0
  %74 = vmatpush.msra.mxu0 0.0
  %75 = vmatpush.msra.mxu0 0.0
  %76 = vmatpush.msra.mxu0 0.0
  %77 = vmatpush.msra.mxu0 %v15
  %78 = vmatpush.msra.mxu0 %v14
  %79 = vmatmul.f32.gmra.mxu0 %v40
  %v80 = vpop.f32.mrf.mxu0
  %v81 = vadd.f32 %v37, %v80
  %82 = vmatmul.f32.gmra.mxu0 %v43
  %v83 = vpop.f32.mrf.mxu0
  %v84 = vadd.f32 %v37, %v83
  %85 = vmatmul.f32.gmra.mxu0 %v46
  %v86 = vpop.f32.mrf.mxu0
  %v87 = vadd.f32 %v37, %v86
  %88 = vmatmul.f32.gmra.mxu0 %v49
  %v89 = vpop.f32.mrf.mxu0
  %v90 = vadd.f32 %v37, %v89
  %91 = vmatmul.f32.gmra.mxu0 %v52
  %v92 = vpop.f32.mrf.mxu0
  %v93 = vadd.f32 %v37, %v92
  %94 = vmatmul.f32.gmra.mxu0 %v55
  %v95 = vpop.f32.mrf.mxu0
  %v96 = vadd.f32 %v37, %v95
  %97 = vmatmul.f32.gmra.mxu0 %v58
  %v98 = vpop.f32.mrf.mxu0
  %v99 = vadd.f32 %v37, %v98
  %100 = vmatmul.f32.gmra.mxu0 %v61
  %v101 = vpop.f32.mrf.mxu0
  %v102 = vadd.f32 %v37, %v101
  %103 = vdwg.mxu0
  %vm104 = vcmask 261120
  %v106 = vsel %vm104, 0.0, 0
  %108 = vmatpush.msra.mxu0 0.0
  %109 = vmatpush.msra.mxu0 0.0
  %110 = vmatpush.msra.mxu0 0.0
  %111 = vmatpush.msra.mxu0 0.0
  %112 = vmatpush.msra.mxu0 0.0
  %113 = vmatpush.msra.mxu0 0.0
  %114 = vmatpush.msra.mxu0 0.0
  %115 = vmatpush.msra.mxu0 0.0
  %116 = vmatpush.msra.mxu0 0.0
  %117 = vmatpush.msra.mxu0 0.0
  %118 = vmatpush.msra.mxu0 0.0
  %119 = vmatpush.msra.mxu0 0.0
  %120 = vmatpush.msra.mxu0 %v19
  %121 = vmatpush.msra.mxu0 %v18
  %122 = vmatpush.msra.mxu0 %v17
  %123 = vmatpush.msra.mxu0 %v16
  %124 = vmatmul.f32.gmra.mxu0 %v106
  %v125 = vpop.f32.mrf.mxu0
  %v126 = vadd.f32 0.0, %v125
  %127 = vdwg.mxu0
  %v128 = vadd.f32 %v81, %v126
  %v129 = vxor.u32 %v128, 2147483648
  %v130 = vmul.f32 %v129, 1.442695
  %v131 = vpow.pop %v130
  %v132 = vadd.f32 %v131, 1.0
  %v133 = vrcp.pop %v132
  %v134 = vmul.f32 %v132, %v133
  %v135 = vsub.f32 1.0, %v134
  %v136 = vmul.f32 %v133, %v135
  %v137 = vadd.f32 %v133, %v136
  %vm138 = vweird.f32 %v132
  %vm139 = vweird.f32 %v133
  %vm140 = vmor %vm138, %vm139
  %v141 = vsel %vm140, %v133, %v137
  %v142 = vand.u32 2147483647, %v132
  %vm143 = vcmp.eq.f32.partialorder %v142, 8.507059e+37
  %v144 = vand.u32 %v132, 2147483648
  %v145 = vor.u32 1.1754944e-38, %v144
  %v146 = vsel %vm143, %v145, %v141
  %v147 = vmul.f32 1.0, %v146
  %v148 = vmul.f32 %v147, 2.0
  %v149 = vsub.f32 %v148, 1.0
  %v150 = vmul.f32 %v147, 0.0
  %152 = vrot.lane.b32.xlu0 %v149, 64
  %v153 = vpop.permute.xlu0 %152
  %v155 = vmul.f32 %v147, %v153
  %157 = vrot.lane.b32.xlu0 %v155, 32
  %v158 = vpop.permute.xlu0 %157
  %v160 = vadd.f32 %v150, %v158
  %v161 = vtanh.pop %v160
  %163 = vrot.lane.b32.xlu0 %v161, 64
  %v164 = vpop.permute.xlu0 %163
  %v166 = vmul.f32 %v147, %v164
  %168 = vrot.lane.b32.xlu0 %v166, 32
  %v169 = vpop.permute.xlu0 %168
  %v170 = vsel %vm104, %v169, 0
  %172 = vmatpush.msra.mxu0 0.0
  %173 = vmatpush.msra.mxu0 0.0
  %174 = vmatpush.msra.mxu0 0.0
  %175 = vmatpush.msra.mxu0 0.0
  %176 = vmatpush.msra.mxu0 0.0
  %177 = vmatpush.msra.mxu0 0.0
  %178 = vmatpush.msra.mxu0 0.0
  %179 = vmatpush.msra.mxu0 0.0
  %180 = vmatpush.msra.mxu0 0.0
  %181 = vmatpush.msra.mxu0 0.0
  %182 = vmatpush.msra.mxu0 0.0
  %183 = vmatpush.msra.mxu0 0.0
  %184 = vmatpush.msra.mxu0 %v19
  %185 = vmatpush.msra.mxu0 %v18
  %186 = vmatpush.msra.mxu0 %v17
  %187 = vmatpush.msra.mxu0 %v16
  %188 = vmatmul.f32.gmra.mxu0 %v170
  %v189 = vpop.f32.mrf.mxu0
  %v190 = vadd.f32 0.0, %v189
  %191 = vdwg.mxu0
  %v192 = vadd.f32 %v84, %v190
  %v193 = vxor.u32 %v192, 2147483648
  %v194 = vmul.f32 %v193, 1.442695
  %v195 = vpow.pop %v194
  %v196 = vadd.f32 %v195, 1.0
  %v197 = vrcp.pop %v196
  %v198 = vmul.f32 %v196, %v197
  %v199 = vsub.f32 1.0, %v198
  %v200 = vmul.f32 %v197, %v199
  %v201 = vadd.f32 %v197, %v200
  %vm202 = vweird.f32 %v196
  %vm203 = vweird.f32 %v197
  %vm204 = vmor %vm202, %vm203
  %v205 = vsel %vm204, %v197, %v201
  %v206 = vand.u32 2147483647, %v196
  %vm207 = vcmp.eq.f32.partialorder %v206, 8.507059e+37
  %v208 = vand.u32 %v196, 2147483648
  %v209 = vor.u32 1.1754944e-38, %v208
  %v210 = vsel %vm207, %v209, %v205
  %v211 = vmul.f32 1.0, %v210
  %v212 = vmul.f32 %v211, 2.0
  %v213 = vsub.f32 %v212, 1.0
  %v214 = vmul.f32 %v211, %v160
  %216 = vrot.lane.b32.xlu0 %v213, 64
  %v217 = vpop.permute.xlu0 %216
  %v219 = vmul.f32 %v211, %v217
  %221 = vrot.lane.b32.xlu0 %v219, 32
  %v222 = vpop.permute.xlu0 %221
  %v224 = vadd.f32 %v214, %v222
  %v225 = vtanh.pop %v224
  %227 = vrot.lane.b32.xlu0 %v225, 64
  %v228 = vpop.permute.xlu0 %227
  %v230 = vmul.f32 %v211, %v228
  %232 = vrot.lane.b32.xlu0 %v230, 32
  %v233 = vpop.permute.xlu0 %232
  %v234 = vsel %vm104, %v233, 0
  %236 = vmatpush.msra.mxu0 0.0
  %237 = vmatpush.msra.mxu0 0.0
  %238 = vmatpush.msra.mxu0 0.0
  %239 = vmatpush.msra.mxu0 0.0
  %240 = vmatpush.msra.mxu0 0.0
  %241 = vmatpush.msra.mxu0 0.0
  %242 = vmatpush.msra.mxu0 0.0
  %243 = vmatpush.msra.mxu0 0.0
  %244 = vmatpush.msra.mxu0 0.0
  %245 = vmatpush.msra.mxu0 0.0
  %246 = vmatpush.msra.mxu0 0.0
  %247 = vmatpush.msra.mxu0 0.0
  %248 = vmatpush.msra.mxu0 %v19
  %249 = vmatpush.msra.mxu0 %v18
  %250 = vmatpush.msra.mxu0 %v17
  %251 = vmatpush.msra.mxu0 %v16
  %252 = vmatmul.f32.gmra.mxu0 %v234
  %v253 = vpop.f32.mrf.mxu0
  %v254 = vadd.f32 0.0, %v253
  %255 = vdwg.mxu0
  %v256 = vadd.f32 %v87, %v254
  %v257 = vxor.u32 %v256, 2147483648
  %v258 = vmul.f32 %v257, 1.442695
  %v259 = vpow.pop %v258
  %v260 = vadd.f32 %v259, 1.0
  %v261 = vrcp.pop %v260
  %v262 = vmul.f32 %v260, %v261
  %v263 = vsub.f32 1.0, %v262
  %v264 = vmul.f32 %v261, %v263
  %v265 = vadd.f32 %v261, %v264
  %vm266 = vweird.f32 %v260
  %vm267 = vweird.f32 %v261
  %vm268 = vmor %vm266, %vm267
  %v269 = vsel %vm268, %v261, %v265
  %v270 = vand.u32 2147483647, %v260
  %vm271 = vcmp.eq.f32.partialorder %v270, 8.507059e+37
  %v272 = vand.u32 %v260, 2147483648
  %v273 = vor.u32 1.1754944e-38, %v272
  %v274 = vsel %vm271, %v273, %v269
  %v275 = vmul.f32 1.0, %v274
  %v276 = vmul.f32 %v275, 2.0
  %v277 = vsub.f32 %v276, 1.0
  %v278 = vmul.f32 %v275, %v224
  %280 = vrot.lane.b32.xlu0 %v277, 64
  %v281 = vpop.permute.xlu0 %280
  %v283 = vmul.f32 %v275, %v281
  %285 = vrot.lane.b32.xlu0 %v283, 32
  %v286 = vpop.permute.xlu0 %285
  %v288 = vadd.f32 %v278, %v286
  %v289 = vtanh.pop %v288
  %291 = vrot.lane.b32.xlu0 %v289, 64
  %v292 = vpop.permute.xlu0 %291
  %v294 = vmul.f32 %v275, %v292
  %296 = vrot.lane.b32.xlu0 %v294, 32
  %v297 = vpop.permute.xlu0 %296
  %v298 = vsel %vm104, %v297, 0
  %300 = vmatpush.msra.mxu0 0.0
  %301 = vmatpush.msra.mxu0 0.0
  %302 = vmatpush.msra.mxu0 0.0
  %303 = vmatpush.msra.mxu0 0.0
  %304 = vmatpush.msra.mxu0 0.0
  %305 = vmatpush.msra.mxu0 0.0
  %306 = vmatpush.msra.mxu0 0.0
  %307 = vmatpush.msra.mxu0 0.0
  %308 = vmatpush.msra.mxu0 0.0
  %309 = vmatpush.msra.mxu0 0.0
  %310 = vmatpush.msra.mxu0 0.0
  %311 = vmatpush.msra.mxu0 0.0
  %312 = vmatpush.msra.mxu0 %v19
  %313 = vmatpush.msra.mxu0 %v18
  %314 = vmatpush.msra.mxu0 %v17
  %315 = vmatpush.msra.mxu0 %v16
  %316 = vmatmul.f32.gmra.mxu0 %v298
  %v317 = vpop.f32.mrf.mxu0
  %v318 = vadd.f32 0.0, %v317
  %319 = vdwg.mxu0
  %v320 = vadd.f32 %v90, %v318
  %v321 = vxor.u32 %v320, 2147483648
  %v322 = vmul.f32 %v321, 1.442695
  %v323 = vpow.pop %v322
  %v324 = vadd.f32 %v323, 1.0
  %v325 = vrcp.pop %v324
  %v326 = vmul.f32 %v324, %v325
  %v327 = vsub.f32 1.0, %v326
  %v328 = vmul.f32 %v325, %v327
  %v329 = vadd.f32 %v325, %v328
  %vm330 = vweird.f32 %v324
  %vm331 = vweird.f32 %v325
  %vm332 = vmor %vm330, %vm331
  %v333 = vsel %vm332, %v325, %v329
  %v334 = vand.u32 2147483647, %v324
  %vm335 = vcmp.eq.f32.partialorder %v334, 8.507059e+37
  %v336 = vand.u32 %v324, 2147483648
  %v337 = vor.u32 1.1754944e-38, %v336
  %v338 = vsel %vm335, %v337, %v333
  %v339 = vmul.f32 1.0, %v338
  %v340 = vmul.f32 %v339, 2.0
  %v341 = vsub.f32 %v340, 1.0
  %v342 = vmul.f32 %v339, %v288
  %344 = vrot.lane.b32.xlu0 %v341, 64
  %v345 = vpop.permute.xlu0 %344
  %v347 = vmul.f32 %v339, %v345
  %349 = vrot.lane.b32.xlu0 %v347, 32
  %v350 = vpop.permute.xlu0 %349
  %v352 = vadd.f32 %v342, %v350
  %v353 = vtanh.pop %v352
  %355 = vrot.lane.b32.xlu0 %v353, 64
  %v356 = vpop.permute.xlu0 %355
  %v358 = vmul.f32 %v339, %v356
  %360 = vrot.lane.b32.xlu0 %v358, 32
  %v361 = vpop.permute.xlu0 %360
  %v362 = vsel %vm104, %v361, 0
  %364 = vmatpush.msra.mxu0 0.0
  %365 = vmatpush.msra.mxu0 0.0
  %366 = vmatpush.msra.mxu0 0.0
  %367 = vmatpush.msra.mxu0 0.0
  %368 = vmatpush.msra.mxu0 0.0
  %369 = vmatpush.msra.mxu0 0.0
  %370 = vmatpush.msra.mxu0 0.0
  %371 = vmatpush.msra.mxu0 0.0
  %372 = vmatpush.msra.mxu0 0.0
  %373 = vmatpush.msra.mxu0 0.0
  %374 = vmatpush.msra.mxu0 0.0
  %375 = vmatpush.msra.mxu0 0.0
  %376 = vmatpush.msra.mxu0 %v19
  %377 = vmatpush.msra.mxu0 %v18
  %378 = vmatpush.msra.mxu0 %v17
  %379 = vmatpush.msra.mxu0 %v16
  %380 = vmatmul.f32.gmra.mxu0 %v362
  %v381 = vpop.f32.mrf.mxu0
  %v382 = vadd.f32 0.0, %v381
  %383 = vdwg.mxu0
  %v384 = vadd.f32 %v93, %v382
  %v385 = vxor.u32 %v384, 2147483648
  %v386 = vmul.f32 %v385, 1.442695
  %v387 = vpow.pop %v386
  %v388 = vadd.f32 %v387, 1.0
  %v389 = vrcp.pop %v388
  %v390 = vmul.f32 %v388, %v389
  %v391 = vsub.f32 1.0, %v390
  %v392 = vmul.f32 %v389, %v391
  %v393 = vadd.f32 %v389, %v392
  %vm394 = vweird.f32 %v388
  %vm395 = vweird.f32 %v389
  %vm396 = vmor %vm394, %vm395
  %v397 = vsel %vm396, %v389, %v393
  %v398 = vand.u32 2147483647, %v388
  %vm399 = vcmp.eq.f32.partialorder %v398, 8.507059e+37
  %v400 = vand.u32 %v388, 2147483648
  %v401 = vor.u32 1.1754944e-38, %v400
  %v402 = vsel %vm399, %v401, %v397
  %v403 = vmul.f32 1.0, %v402
  %v404 = vmul.f32 %v403, 2.0
  %v405 = vsub.f32 %v404, 1.0
  %v406 = vmul.f32 %v403, %v352
  %408 = vrot.lane.b32.xlu0 %v405, 64
  %v409 = vpop.permute.xlu0 %408
  %v411 = vmul.f32 %v403, %v409
  %413 = vrot.lane.b32.xlu0 %v411, 32
  %v414 = vpop.permute.xlu0 %413
  %v416 = vadd.f32 %v406, %v414
  %v417 = vtanh.pop %v416
  %419 = vrot.lane.b32.xlu0 %v417, 64
  %v420 = vpop.permute.xlu0 %419
  %v422 = vmul.f32 %v403, %v420
  %424 = vrot.lane.b32.xlu0 %v422, 32
  %v425 = vpop.permute.xlu0 %424
  %v426 = vsel %vm104, %v425, 0
  %428 = vmatpush.msra.mxu0 0.0
  %429 = vmatpush.msra.mxu0 0.0
  %430 = vmatpush.msra.mxu0 0.0
  %431 = vmatpush.msra.mxu0 0.0
  %432 = vmatpush.msra.mxu0 0.0
  %433 = vmatpush.msra.mxu0 0.0
  %434 = vmatpush.msra.mxu0 0.0
  %435 = vmatpush.msra.mxu0 0.0
  %436 = vmatpush.msra.mxu0 0.0
  %437 = vmatpush.msra.mxu0 0.0
  %438 = vmatpush.msra.mxu0 0.0
  %439 = vmatpush.msra.mxu0 0.0
  %440 = vmatpush.msra.mxu0 %v19
  %441 = vmatpush.msra.mxu0 %v18
  %442 = vmatpush.msra.mxu0 %v17
  %443 = vmatpush.msra.mxu0 %v16
  %444 = vmatmul.f32.gmra.mxu0 %v426
  %v445 = vpop.f32.mrf.mxu0
  %v446 = vadd.f32 0.0, %v445
  %447 = vdwg.mxu0
  %v448 = vadd.f32 %v96, %v446
  %v449 = vxor.u32 %v448, 2147483648
  %v450 = vmul.f32 %v449, 1.442695
  %v451 = vpow.pop %v450
  %v452 = vadd.f32 %v451, 1.0
  %v453 = vrcp.pop %v452
  %v454 = vmul.f32 %v452, %v453
  %v455 = vsub.f32 1.0, %v454
  %v456 = vmul.f32 %v453, %v455
  %v457 = vadd.f32 %v453, %v456
  %vm458 = vweird.f32 %v452
  %vm459 = vweird.f32 %v453
  %vm460 = vmor %vm458, %vm459
  %v461 = vsel %vm460, %v453, %v457
  %v462 = vand.u32 2147483647, %v452
  %vm463 = vcmp.eq.f32.partialorder %v462, 8.507059e+37
  %v464 = vand.u32 %v452, 2147483648
  %v465 = vor.u32 1.1754944e-38, %v464
  %v466 = vsel %vm463, %v465, %v461
  %v467 = vmul.f32 1.0, %v466
  %v468 = vmul.f32 %v467, 2.0
  %v469 = vsub.f32 %v468, 1.0
  %v470 = vmul.f32 %v467, %v416
  %472 = vrot.lane.b32.xlu0 %v469, 64
  %v473 = vpop.permute.xlu0 %472
  %v475 = vmul.f32 %v467, %v473
  %477 = vrot.lane.b32.xlu0 %v475, 32
  %v478 = vpop.permute.xlu0 %477
  %v480 = vadd.f32 %v470, %v478
  %v481 = vtanh.pop %v480
  %483 = vrot.lane.b32.xlu0 %v481, 64
  %v484 = vpop.permute.xlu0 %483
  %v486 = vmul.f32 %v467, %v484
  %488 = vrot.lane.b32.xlu0 %v486, 32
  %v489 = vpop.permute.xlu0 %488
  %v490 = vsel %vm104, %v489, 0
  %492 = vmatpush.msra.mxu0 0.0
  %493 = vmatpush.msra.mxu0 0.0
  %494 = vmatpush.msra.mxu0 0.0
  %495 = vmatpush.msra.mxu0 0.0
  %496 = vmatpush.msra.mxu0 0.0
  %497 = vmatpush.msra.mxu0 0.0
  %498 = vmatpush.msra.mxu0 0.0
  %499 = vmatpush.msra.mxu0 0.0
  %500 = vmatpush.msra.mxu0 0.0
  %501 = vmatpush.msra.mxu0 0.0
  %502 = vmatpush.msra.mxu0 0.0
  %503 = vmatpush.msra.mxu0 0.0
  %504 = vmatpush.msra.mxu0 %v19
  %505 = vmatpush.msra.mxu0 %v18
  %506 = vmatpush.msra.mxu0 %v17
  %507 = vmatpush.msra.mxu0 %v16
  %508 = vmatmul.f32.gmra.mxu0 %v490
  %v509 = vpop.f32.mrf.mxu0
  %v510 = vadd.f32 0.0, %v509
  %511 = vdwg.mxu0
  %v512 = vadd.f32 %v99, %v510
  %v513 = vxor.u32 %v512, 2147483648
  %v514 = vmul.f32 %v513, 1.442695
  %v515 = vpow.pop %v514
  %v516 = vadd.f32 %v515, 1.0
  %v517 = vrcp.pop %v516
  %v518 = vmul.f32 %v516, %v517
  %v519 = vsub.f32 1.0, %v518
  %v520 = vmul.f32 %v517, %v519
  %v521 = vadd.f32 %v517, %v520
  %vm522 = vweird.f32 %v516
  %vm523 = vweird.f32 %v517
  %vm524 = vmor %vm522, %vm523
  %v525 = vsel %vm524, %v517, %v521
  %v526 = vand.u32 2147483647, %v516
  %vm527 = vcmp.eq.f32.partialorder %v526, 8.507059e+37
  %v528 = vand.u32 %v516, 2147483648
  %v529 = vor.u32 1.1754944e-38, %v528
  %v530 = vsel %vm527, %v529, %v525
  %v531 = vmul.f32 1.0, %v530
  %v532 = vmul.f32 %v531, 2.0
  %v533 = vsub.f32 %v532, 1.0
  %v534 = vmul.f32 %v531, %v480
  %536 = vrot.lane.b32.xlu0 %v533, 64
  %v537 = vpop.permute.xlu0 %536
  %v539 = vmul.f32 %v531, %v537
  %541 = vrot.lane.b32.xlu0 %v539, 32
  %v542 = vpop.permute.xlu0 %541
  %v544 = vadd.f32 %v534, %v542
  %v545 = vtanh.pop %v544
  %547 = vrot.lane.b32.xlu0 %v545, 64
  %v548 = vpop.permute.xlu0 %547
  %v550 = vmul.f32 %v531, %v548
  %552 = vrot.lane.b32.xlu0 %v550, 32
  %v553 = vpop.permute.xlu0 %552
  %v554 = vsel %vm104, %v553, 0
  %556 = vmatpush.msra.mxu0 0.0
  %557 = vmatpush.msra.mxu0 0.0
  %558 = vmatpush.msra.mxu0 0.0
  %559 = vmatpush.msra.mxu0 0.0
  %560 = vmatpush.msra.mxu0 0.0
  %561 = vmatpush.msra.mxu0 0.0
  %562 = vmatpush.msra.mxu0 0.0
  %563 = vmatpush.msra.mxu0 0.0
  %564 = vmatpush.msra.mxu0 0.0
  %565 = vmatpush.msra.mxu0 0.0
  %566 = vmatpush.msra.mxu0 0.0
  %567 = vmatpush.msra.mxu0 0.0
  %568 = vmatpush.msra.mxu0 %v19
  %569 = vmatpush.msra.mxu0 %v18
  %570 = vmatpush.msra.mxu0 %v17
  %571 = vmatpush.msra.mxu0 %v16
  %572 = vmatmul.f32.gmra.mxu0 %v554
  %v573 = vpop.f32.mrf.mxu0
  %v574 = vadd.f32 0.0, %v573
  %575 = vdwg.mxu0
  %v576 = vadd.f32 %v102, %v574
  %v577 = vxor.u32 %v576, 2147483648
  %v578 = vmul.f32 %v577, 1.442695
  %v579 = vpow.pop %v578
  %v580 = vadd.f32 %v579, 1.0
  %v581 = vrcp.pop %v580
  %v582 = vmul.f32 %v580, %v581
  %v583 = vsub.f32 1.0, %v582
  %v584 = vmul.f32 %v581, %v583
  %v585 = vadd.f32 %v581, %v584
  %vm586 = vweird.f32 %v580
  %vm587 = vweird.f32 %v581
  %vm588 = vmor %vm586, %vm587
  %v589 = vsel %vm588, %v581, %v585
  %v590 = vand.u32 2147483647, %v580
  %vm591 = vcmp.eq.f32.partialorder %v590, 8.507059e+37
  %v592 = vand.u32 %v580, 2147483648
  %v593 = vor.u32 1.1754944e-38, %v592
  %v594 = vsel %vm591, %v593, %v589
  %v595 = vmul.f32 1.0, %v594
  %v596 = vmul.f32 %v595, 2.0
  %v597 = vsub.f32 %v596, 1.0
  %v598 = vmul.f32 %v595, %v544
  %600 = vrot.lane.b32.xlu0 %v597, 64
  %v601 = vpop.permute.xlu0 %600
  %v603 = vmul.f32 %v595, %v601
  %605 = vrot.lane.b32.xlu0 %v603, 32
  %v606 = vpop.permute.xlu0 %605
  %v608 = vadd.f32 %v598, %v606
  %v609 = vtanh.pop %v608
  %611 = vrot.lane.b32.xlu0 %v609, 64
  %v612 = vpop.permute.xlu0 %611
  %v614 = vmul.f32 %v595, %v612
  %v615 = vperm.slane %v28, 1
  %617 = vrot.lane.b32.xlu0 %v614, 32
  %v618 = vpop.permute.xlu0 %617
  %v619 = vsel %vm104, %v618, 0
  %621 = vmatpush.msra.mxu0 0.0
  %622 = vmatpush.msra.mxu0 0.0
  %623 = vmatpush.msra.mxu0 0.0
  %624 = vmatpush.msra.mxu0 0.0
  %625 = vmatpush.msra.mxu0 0.0
  %626 = vmatpush.msra.mxu0 0.0
  %627 = vmatpush.msra.mxu0 0.0
  %628 = vmatpush.msra.mxu0 0.0
  %629 = vmatpush.msra.mxu0 0.0
  %630 = vmatpush.msra.mxu0 0.0
  %631 = vmatpush.msra.mxu0 0.0
  %632 = vmatpush.msra.mxu0 0.0
  %633 = vmatpush.msra.mxu0 %v23
  %634 = vmatpush.msra.mxu0 %v22
  %635 = vmatpush.msra.mxu0 %v21
  %636 = vmatpush.msra.mxu0 %v20
  %637 = vmatmul.f32.gmra.mxu0 %v170
  %v638 = vpop.f32.mrf.mxu0
  %v639 = vadd.f32 %v615, %v638
  %640 = vmatmul.f32.gmra.mxu0 %v234
  %v641 = vpop.f32.mrf.mxu0
  %v642 = vadd.f32 %v615, %v641
  %643 = vmatmul.f32.gmra.mxu0 %v298
  %v644 = vpop.f32.mrf.mxu0
  %v645 = vadd.f32 %v615, %v644
  %646 = vmatmul.f32.gmra.mxu0 %v362
  %v647 = vpop.f32.mrf.mxu0
  %v648 = vadd.f32 %v615, %v647
  %649 = vmatmul.f32.gmra.mxu0 %v426
  %v650 = vpop.f32.mrf.mxu0
  %v651 = vadd.f32 %v615, %v650
  %652 = vmatmul.f32.gmra.mxu0 %v490
  %v653 = vpop.f32.mrf.mxu0
  %v654 = vadd.f32 %v615, %v653
  %655 = vmatmul.f32.gmra.mxu0 %v554
  %v656 = vpop.f32.mrf.mxu0
  %v657 = vadd.f32 %v615, %v656
  %658 = vmatmul.f32.gmra.mxu0 %v619
  %v659 = vpop.f32.mrf.mxu0
  %v660 = vadd.f32 %v615, %v659
  %661 = vdwg.mxu0
  %662 = vmatpush.msra.mxu0 0.0
  %663 = vmatpush.msra.mxu0 0.0
  %664 = vmatpush.msra.mxu0 0.0
  %665 = vmatpush.msra.mxu0 0.0
  %666 = vmatpush.msra.mxu0 0.0
  %667 = vmatpush.msra.mxu0 0.0
  %668 = vmatpush.msra.mxu0 0.0
  %669 = vmatpush.msra.mxu0 0.0
  %670 = vmatpush.msra.mxu0 0.0
  %671 = vmatpush.msra.mxu0 0.0
  %672 = vmatpush.msra.mxu0 0.0
  %673 = vmatpush.msra.mxu0 0.0
  %674 = vmatpush.msra.mxu0 %v27
  %675 = vmatpush.msra.mxu0 %v26
  %676 = vmatpush.msra.mxu0 %v25
  %677 = vmatpush.msra.mxu0 %v24
  %678 = vmatmul.f32.gmra.mxu0 %v106
  %v679 = vpop.f32.mrf.mxu0
  %v680 = vadd.f32 0.0, %v679
  %681 = vdwg.mxu0
  %v682 = vadd.f32 %v639, %v680
  %v683 = vxor.u32 %v682, 2147483648
  %v684 = vmul.f32 %v683, 1.442695
  %v685 = vpow.pop %v684
  %v686 = vadd.f32 %v685, 1.0
  %v687 = vrcp.pop %v686
  %v688 = vmul.f32 %v686, %v687
  %v689 = vsub.f32 1.0, %v688
  %v690 = vmul.f32 %v687, %v689
  %v691 = vadd.f32 %v687, %v690
  %vm692 = vweird.f32 %v686
  %vm693 = vweird.f32 %v687
  %vm694 = vmor %vm692, %vm693
  %v695 = vsel %vm694, %v687, %v691
  %v696 = vand.u32 2147483647, %v686
  %vm697 = vcmp.eq.f32.partialorder %v696, 8.507059e+37
  %v698 = vand.u32 %v686, 2147483648
  %v699 = vor.u32 1.1754944e-38, %v698
  %v700 = vsel %vm697, %v699, %v695
  %v701 = vmul.f32 1.0, %v700
  %v702 = vmul.f32 %v701, 2.0
  %v703 = vsub.f32 %v702, 1.0
  %v704 = vmul.f32 %v701, 0.0
  %706 = vrot.lane.b32.xlu0 %v703, 64
  %v707 = vpop.permute.xlu0 %706
  %v709 = vmul.f32 %v701, %v707
  %711 = vrot.lane.b32.xlu0 %v709, 32
  %v712 = vpop.permute.xlu0 %711
  %v714 = vadd.f32 %v704, %v712
  %v715 = vtanh.pop %v714
  %717 = vrot.lane.b32.xlu0 %v715, 64
  %v718 = vpop.permute.xlu0 %717
  %v720 = vmul.f32 %v701, %v718
  %722 = vrot.lane.b32.xlu0 %v720, 32
  %v723 = vpop.permute.xlu0 %722
  %v724 = vsel %vm104, %v723, 0
  %726 = vmatpush.msra.mxu0 0.0
  %727 = vmatpush.msra.mxu0 0.0
  %728 = vmatpush.msra.mxu0 0.0
  %729 = vmatpush.msra.mxu0 0.0
  %730 = vmatpush.msra.mxu0 0.0
  %731 = vmatpush.msra.mxu0 0.0
  %732 = vmatpush.msra.mxu0 0.0
  %733 = vmatpush.msra.mxu0 0.0
  %734 = vmatpush.msra.mxu0 0.0
  %735 = vmatpush.msra.mxu0 0.0
  %736 = vmatpush.msra.mxu0 0.0
  %737 = vmatpush.msra.mxu0 0.0
  %738 = vmatpush.msra.mxu0 %v27
  %739 = vmatpush.msra.mxu0 %v26
  %740 = vmatpush.msra.mxu0 %v25
  %741 = vmatpush.msra.mxu0 %v24
  %742 = vmatmul.f32.gmra.mxu0 %v724
  %v743 = vpop.f32.mrf.mxu0
  %v744 = vadd.f32 0.0, %v743
  %745 = vdwg.mxu0
  %v746 = vadd.f32 %v642, %v744
  %v747 = vxor.u32 %v746, 2147483648
  %v748 = vmul.f32 %v747, 1.442695
  %v749 = vpow.pop %v748
  %v750 = vadd.f32 %v749, 1.0
  %v751 = vrcp.pop %v750
  %v752 = vmul.f32 %v750, %v751
  %v753 = vsub.f32 1.0, %v752
  %v754 = vmul.f32 %v751, %v753
  %v755 = vadd.f32 %v751, %v754
  %vm756 = vweird.f32 %v750
  %vm757 = vweird.f32 %v751
  %vm758 = vmor %vm756, %vm757
  %v759 = vsel %vm758, %v751, %v755
  %v760 = vand.u32 2147483647, %v750
  %vm761 = vcmp.eq.f32.partialorder %v760, 8.507059e+37
  %v762 = vand.u32 %v750, 2147483648
  %v763 = vor.u32 1.1754944e-38, %v762
  %v764 = vsel %vm761, %v763, %v759
  %v765 = vmul.f32 1.0, %v764
  %v766 = vmul.f32 %v765, 2.0
  %v767 = vsub.f32 %v766, 1.0
  %v768 = vmul.f32 %v765, %v714
  %770 = vrot.lane.b32.xlu0 %v767, 64
  %v771 = vpop.permute.xlu0 %770
  %v773 = vmul.f32 %v765, %v771
  %775 = vrot.lane.b32.xlu0 %v773, 32
  %v776 = vpop.permute.xlu0 %775
  %v778 = vadd.f32 %v768, %v776
  %v779 = vtanh.pop %v778
  %781 = vrot.lane.b32.xlu0 %v779, 64
  %v782 = vpop.permute.xlu0 %781
  %v784 = vmul.f32 %v765, %v782
  %786 = vrot.lane.b32.xlu0 %v784, 32
  %v787 = vpop.permute.xlu0 %786
  %v788 = vsel %vm104, %v787, 0
  %790 = vmatpush.msra.mxu0 0.0
  %791 = vmatpush.msra.mxu0 0.0
  %792 = vmatpush.msra.mxu0 0.0
  %793 = vmatpush.msra.mxu0 0.0
  %794 = vmatpush.msra.mxu0 0.0
  %795 = vmatpush.msra.mxu0 0.0
  %796 = vmatpush.msra.mxu0 0.0
  %797 = vmatpush.msra.mxu0 0.0
  %798 = vmatpush.msra.mxu0 0.0
  %799 = vmatpush.msra.mxu0 0.0
  %800 = vmatpush.msra.mxu0 0.0
  %801 = vmatpush.msra.mxu0 0.0
  %802 = vmatpush.msra.mxu0 %v27
  %803 = vmatpush.msra.mxu0 %v26
  %804 = vmatpush.msra.mxu0 %v25
  %805 = vmatpush.msra.mxu0 %v24
  %806 = vmatmul.f32.gmra.mxu0 %v788
  %v807 = vpop.f32.mrf.mxu0
  %v808 = vadd.f32 0.0, %v807
  %809 = vdwg.mxu0
  %v810 = vadd.f32 %v645, %v808
  %v811 = vxor.u32 %v810, 2147483648
  %v812 = vmul.f32 %v811, 1.442695
  %v813 = vpow.pop %v812
  %v814 = vadd.f32 %v813, 1.0
  %v815 = vrcp.pop %v814
  %v816 = vmul.f32 %v814, %v815
  %v817 = vsub.f32 1.0, %v816
  %v818 = vmul.f32 %v815, %v817
  %v819 = vadd.f32 %v815, %v818
  %vm820 = vweird.f32 %v814
  %vm821 = vweird.f32 %v815
  %vm822 = vmor %vm820, %vm821
  %v823 = vsel %vm822, %v815, %v819
  %v824 = vand.u32 2147483647, %v814
  %vm825 = vcmp.eq.f32.partialorder %v824, 8.507059e+37
  %v826 = vand.u32 %v814, 2147483648
  %v827 = vor.u32 1.1754944e-38, %v826
  %v828 = vsel %vm825, %v827, %v823
  %v829 = vmul.f32 1.0, %v828
  %v830 = vmul.f32 %v829, 2.0
  %v831 = vsub.f32 %v830, 1.0
  %v832 = vmul.f32 %v829, %v778
  %834 = vrot.lane.b32.xlu0 %v831, 64
  %v835 = vpop.permute.xlu0 %834
  %v837 = vmul.f32 %v829, %v835
  %839 = vrot.lane.b32.xlu0 %v837, 32
  %v840 = vpop.permute.xlu0 %839
  %v842 = vadd.f32 %v832, %v840
  %v843 = vtanh.pop %v842
  %845 = vrot.lane.b32.xlu0 %v843, 64
  %v846 = vpop.permute.xlu0 %845
  %v848 = vmul.f32 %v829, %v846
  %850 = vrot.lane.b32.xlu0 %v848, 32
  %v851 = vpop.permute.xlu0 %850
  %v852 = vsel %vm104, %v851, 0
  %854 = vmatpush.msra.mxu0 0.0
  %855 = vmatpush.msra.mxu0 0.0
  %856 = vmatpush.msra.mxu0 0.0
  %857 = vmatpush.msra.mxu0 0.0
  %858 = vmatpush.msra.mxu0 0.0
  %859 = vmatpush.msra.mxu0 0.0
  %860 = vmatpush.msra.mxu0 0.0
  %861 = vmatpush.msra.mxu0 0.0
  %862 = vmatpush.msra.mxu0 0.0
  %863 = vmatpush.msra.mxu0 0.0
  %864 = vmatpush.msra.mxu0 0.0
  %865 = vmatpush.msra.mxu0 0.0
  %866 = vmatpush.msra.mxu0 %v27
  %867 = vmatpush.msra.mxu0 %v26
  %868 = vmatpush.msra.mxu0 %v25
  %869 = vmatpush.msra.mxu0 %v24
  %870 = vmatmul.f32.gmra.mxu0 %v852
  %v871 = vpop.f32.mrf.mxu0
  %v872 = vadd.f32 0.0, %v871
  %873 = vdwg.mxu0
  %v874 = vadd.f32 %v648, %v872
  %v875 = vxor.u32 %v874, 2147483648
  %v876 = vmul.f32 %v875, 1.442695
  %v877 = vpow.pop %v876
  %v878 = vadd.f32 %v877, 1.0
  %v879 = vrcp.pop %v878
  %v880 = vmul.f32 %v878, %v879
  %v881 = vsub.f32 1.0, %v880
  %v882 = vmul.f32 %v879, %v881
  %v883 = vadd.f32 %v879, %v882
  %vm884 = vweird.f32 %v878
  %vm885 = vweird.f32 %v879
  %vm886 = vmor %vm884, %vm885
  %v887 = vsel %vm886, %v879, %v883
  %v888 = vand.u32 2147483647, %v878
  %vm889 = vcmp.eq.f32.partialorder %v888, 8.507059e+37
  %v890 = vand.u32 %v878, 2147483648
  %v891 = vor.u32 1.1754944e-38, %v890
  %v892 = vsel %vm889, %v891, %v887
  %v893 = vmul.f32 1.0, %v892
  %v894 = vmul.f32 %v893, 2.0
  %v895 = vsub.f32 %v894, 1.0
  %v896 = vmul.f32 %v893, %v842
  %898 = vrot.lane.b32.xlu0 %v895, 64
  %v899 = vpop.permute.xlu0 %898
  %v901 = vmul.f32 %v893, %v899
  %903 = vrot.lane.b32.xlu0 %v901, 32
  %v904 = vpop.permute.xlu0 %903
  %v906 = vadd.f32 %v896, %v904
  %v907 = vtanh.pop %v906
  %909 = vrot.lane.b32.xlu0 %v907, 64
  %v910 = vpop.permute.xlu0 %909
  %v912 = vmul.f32 %v893, %v910
  %914 = vrot.lane.b32.xlu0 %v912, 32
  %v915 = vpop.permute.xlu0 %914
  %v916 = vsel %vm104, %v915, 0
  %918 = vmatpush.msra.mxu0 0.0
  %919 = vmatpush.msra.mxu0 0.0
  %920 = vmatpush.msra.mxu0 0.0
  %921 = vmatpush.msra.mxu0 0.0
  %922 = vmatpush.msra.mxu0 0.0
  %923 = vmatpush.msra.mxu0 0.0
  %924 = vmatpush.msra.mxu0 0.0
  %925 = vmatpush.msra.mxu0 0.0
  %926 = vmatpush.msra.mxu0 0.0
  %927 = vmatpush.msra.mxu0 0.0
  %928 = vmatpush.msra.mxu0 0.0
  %929 = vmatpush.msra.mxu0 0.0
  %930 = vmatpush.msra.mxu0 %v27
  %931 = vmatpush.msra.mxu0 %v26
  %932 = vmatpush.msra.mxu0 %v25
  %933 = vmatpush.msra.mxu0 %v24
  %934 = vmatmul.f32.gmra.mxu0 %v916
  %v935 = vpop.f32.mrf.mxu0
  %v936 = vadd.f32 0.0, %v935
  %937 = vdwg.mxu0
  %v938 = vadd.f32 %v651, %v936
  %v939 = vxor.u32 %v938, 2147483648
  %v940 = vmul.f32 %v939, 1.442695
  %v941 = vpow.pop %v940
  %v942 = vadd.f32 %v941, 1.0
  %v943 = vrcp.pop %v942
  %v944 = vmul.f32 %v942, %v943
  %v945 = vsub.f32 1.0, %v944
  %v946 = vmul.f32 %v943, %v945
  %v947 = vadd.f32 %v943, %v946
  %vm948 = vweird.f32 %v942
  %vm949 = vweird.f32 %v943
  %vm950 = vmor %vm948, %vm949
  %v951 = vsel %vm950, %v943, %v947
  %v952 = vand.u32 2147483647, %v942
  %vm953 = vcmp.eq.f32.partialorder %v952, 8.507059e+37
  %v954 = vand.u32 %v942, 2147483648
  %v955 = vor.u32 1.1754944e-38, %v954
  %v956 = vsel %vm953, %v955, %v951
  %v957 = vmul.f32 1.0, %v956
  %v958 = vmul.f32 %v957, 2.0
  %v959 = vsub.f32 %v958, 1.0
  %v960 = vmul.f32 %v957, %v906
  %962 = vrot.lane.b32.xlu0 %v959, 64
  %v963 = vpop.permute.xlu0 %962
  %v965 = vmul.f32 %v957, %v963
  %967 = vrot.lane.b32.xlu0 %v965, 32
  %v968 = vpop.permute.xlu0 %967
  %v970 = vadd.f32 %v960, %v968
  %v971 = vtanh.pop %v970
  %973 = vrot.lane.b32.xlu0 %v971, 64
  %v974 = vpop.permute.xlu0 %973
  %v976 = vmul.f32 %v957, %v974
  %978 = vrot.lane.b32.xlu0 %v976, 32
  %v979 = vpop.permute.xlu0 %978
  %v980 = vsel %vm104, %v979, 0
  %982 = vmatpush.msra.mxu0 0.0
  %983 = vmatpush.msra.mxu0 0.0
  %984 = vmatpush.msra.mxu0 0.0
  %985 = vmatpush.msra.mxu0 0.0
  %986 = vmatpush.msra.mxu0 0.0
  %987 = vmatpush.msra.mxu0 0.0
  %988 = vmatpush.msra.mxu0 0.0
  %989 = vmatpush.msra.mxu0 0.0
  %990 = vmatpush.msra.mxu0 0.0
  %991 = vmatpush.msra.mxu0 0.0
  %992 = vmatpush.msra.mxu0 0.0
  %993 = vmatpush.msra.mxu0 0.0
  %994 = vmatpush.msra.mxu0 %v27
  %995 = vmatpush.msra.mxu0 %v26
  %996 = vmatpush.msra.mxu0 %v25
  %997 = vmatpush.msra.mxu0 %v24
  %998 = vmatmul.f32.gmra.mxu0 %v980
  %v999 = vpop.f32.mrf.mxu0
  %v1000 = vadd.f32 0.0, %v999
  %1001 = vdwg.mxu0
  %v1002 = vadd.f32 %v654, %v1000
  %v1003 = vxor.u32 %v1002, 2147483648
  %v1004 = vmul.f32 %v1003, 1.442695
  %v1005 = vpow.pop %v1004
  %v1006 = vadd.f32 %v1005, 1.0
  %v1007 = vrcp.pop %v1006
  %v1008 = vmul.f32 %v1006, %v1007
  %v1009 = vsub.f32 1.0, %v1008
  %v1010 = vmul.f32 %v1007, %v1009
  %v1011 = vadd.f32 %v1007, %v1010
  %vm1012 = vweird.f32 %v1006
  %vm1013 = vweird.f32 %v1007
  %vm1014 = vmor %vm1012, %vm1013
  %v1015 = vsel %vm1014, %v1007, %v1011
  %v1016 = vand.u32 2147483647, %v1006
  %vm1017 = vcmp.eq.f32.partialorder %v1016, 8.507059e+37
  %v1018 = vand.u32 %v1006, 2147483648
  %v1019 = vor.u32 1.1754944e-38, %v1018
  %v1020 = vsel %vm1017, %v1019, %v1015
  %v1021 = vmul.f32 1.0, %v1020
  %v1022 = vmul.f32 %v1021, 2.0
  %v1023 = vsub.f32 %v1022, 1.0
  %v1024 = vmul.f32 %v1021, %v970
  %1026 = vrot.lane.b32.xlu0 %v1023, 64
  %v1027 = vpop.permute.xlu0 %1026
  %v1029 = vmul.f32 %v1021, %v1027
  %1031 = vrot.lane.b32.xlu0 %v1029, 32
  %v1032 = vpop.permute.xlu0 %1031
  %v1034 = vadd.f32 %v1024, %v1032
  %v1035 = vtanh.pop %v1034
  %1037 = vrot.lane.b32.xlu0 %v1035, 64
  %v1038 = vpop.permute.xlu0 %1037
  %v1040 = vmul.f32 %v1021, %v1038
  %1042 = vrot.lane.b32.xlu0 %v1040, 32
  %v1043 = vpop.permute.xlu0 %1042
  %v1044 = vsel %vm104, %v1043, 0
  %1046 = vmatpush.msra.mxu0 0.0
  %1047 = vmatpush.msra.mxu0 0.0
  %1048 = vmatpush.msra.mxu0 0.0
  %1049 = vmatpush.msra.mxu0 0.0
  %1050 = vmatpush.msra.mxu0 0.0
  %1051 = vmatpush.msra.mxu0 0.0
  %1052 = vmatpush.msra.mxu0 0.0
  %1053 = vmatpush.msra.mxu0 0.0
  %1054 = vmatpush.msra.mxu0 0.0
  %1055 = vmatpush.msra.mxu0 0.0
  %1056 = vmatpush.msra.mxu0 0.0
  %1057 = vmatpush.msra.mxu0 0.0
  %1058 = vmatpush.msra.mxu0 %v27
  %1059 = vmatpush.msra.mxu0 %v26
  %1060 = vmatpush.msra.mxu0 %v25
  %1061 = vmatpush.msra.mxu0 %v24
  %1062 = vmatmul.f32.gmra.mxu0 %v1044
  %v1063 = vpop.f32.mrf.mxu0
  %v1064 = vadd.f32 0.0, %v1063
  %1065 = vdwg.mxu0
  %v1066 = vadd.f32 %v657, %v1064
  %v1067 = vxor.u32 %v1066, 2147483648
  %v1068 = vmul.f32 %v1067, 1.442695
  %v1069 = vpow.pop %v1068
  %v1070 = vadd.f32 %v1069, 1.0
  %v1071 = vrcp.pop %v1070
  %v1072 = vmul.f32 %v1070, %v1071
  %v1073 = vsub.f32 1.0, %v1072
  %v1074 = vmul.f32 %v1071, %v1073
  %v1075 = vadd.f32 %v1071, %v1074
  %vm1076 = vweird.f32 %v1070
  %vm1077 = vweird.f32 %v1071
  %vm1078 = vmor %vm1076, %vm1077
  %v1079 = vsel %vm1078, %v1071, %v1075
  %v1080 = vand.u32 2147483647, %v1070
  %vm1081 = vcmp.eq.f32.partialorder %v1080, 8.507059e+37
  %v1082 = vand.u32 %v1070, 2147483648
  %v1083 = vor.u32 1.1754944e-38, %v1082
  %v1084 = vsel %vm1081, %v1083, %v1079
  %v1085 = vmul.f32 1.0, %v1084
  %v1086 = vmul.f32 %v1085, 2.0
  %v1087 = vsub.f32 %v1086, 1.0
  %v1088 = vmul.f32 %v1085, %v1034
  %1090 = vrot.lane.b32.xlu0 %v1087, 64
  %v1091 = vpop.permute.xlu0 %1090
  %v1093 = vmul.f32 %v1085, %v1091
  %1095 = vrot.lane.b32.xlu0 %v1093, 32
  %v1096 = vpop.permute.xlu0 %1095
  %v1098 = vadd.f32 %v1088, %v1096
  %v1099 = vtanh.pop %v1098
  %1101 = vrot.lane.b32.xlu0 %v1099, 64
  %v1102 = vpop.permute.xlu0 %1101
  %v1104 = vmul.f32 %v1085, %v1102
  %1106 = vrot.lane.b32.xlu0 %v1104, 32
  %v1107 = vpop.permute.xlu0 %1106
  %v1108 = vsel %vm104, %v1107, 0
  %1110 = vmatpush.msra.mxu0 0.0
  %1111 = vmatpush.msra.mxu0 0.0
  %1112 = vmatpush.msra.mxu0 0.0
  %1113 = vmatpush.msra.mxu0 0.0
  %1114 = vmatpush.msra.mxu0 0.0
  %1115 = vmatpush.msra.mxu0 0.0
  %1116 = vmatpush.msra.mxu0 0.0
  %1117 = vmatpush.msra.mxu0 0.0
  %1118 = vmatpush.msra.mxu0 0.0
  %1119 = vmatpush.msra.mxu0 0.0
  %1120 = vmatpush.msra.mxu0 0.0
  %1121 = vmatpush.msra.mxu0 0.0
  %1122 = vmatpush.msra.mxu0 %v27
  %1123 = vmatpush.msra.mxu0 %v26
  %1124 = vmatpush.msra.mxu0 %v25
  %1125 = vmatpush.msra.mxu0 %v24
  %1126 = vmatmul.f32.gmra.mxu0 %v1108
  %v1127 = vpop.f32.mrf.mxu0
  %v1128 = vadd.f32 0.0, %v1127
  %1129 = vdwg.mxu0
  %v1130 = vadd.f32 %v660, %v1128
  %v1131 = vxor.u32 %v1130, 2147483648
  %v1132 = vmul.f32 %v1131, 1.442695
  %v1133 = vpow.pop %v1132
  %v1134 = vadd.f32 %v1133, 1.0
  %v1135 = vrcp.pop %v1134
  %v1136 = vmul.f32 %v1134, %v1135
  %v1137 = vsub.f32 1.0, %v1136
  %v1138 = vmul.f32 %v1135, %v1137
  %v1139 = vadd.f32 %v1135, %v1138
  %vm1140 = vweird.f32 %v1134
  %vm1141 = vweird.f32 %v1135
  %vm1142 = vmor %vm1140, %vm1141
  %v1143 = vsel %vm1142, %v1135, %v1139
  %v1144 = vand.u32 2147483647, %v1134
  %vm1145 = vcmp.eq.f32.partialorder %v1144, 8.507059e+37
  %v1146 = vand.u32 %v1134, 2147483648
  %v1147 = vor.u32 1.1754944e-38, %v1146
  %v1148 = vsel %vm1145, %v1147, %v1143
  %v1149 = vmul.f32 1.0, %v1148
  %v1150 = vmul.f32 %v1149, 2.0
  %v1151 = vsub.f32 %v1150, 1.0
  %v1152 = vmul.f32 %v1149, %v1098
  %1154 = vrot.lane.b32.xlu0 %v1151, 64
  %v1155 = vpop.permute.xlu0 %1154
  %v1157 = vmul.f32 %v1149, %v1155
  %1159 = vrot.lane.b32.xlu0 %v1157, 32
  %v1160 = vpop.permute.xlu0 %1159
  %v1162 = vadd.f32 %v1152, %v1160
  %v1163 = vtanh.pop %v1162
  %1165 = vrot.lane.b32.xlu0 %v1163, 64
  %v1166 = vpop.permute.xlu0 %1165
  %v1168 = vmul.f32 %v1149, %v1166
  %v1169 = vld [vmem:[%s2 + $0x78] sm:$0xff]
  %v1170 = vld [vmem:[%s2 + $0x80] sm:$0xff]
  %v1171 = vld [vmem:[%s2 + $0x88] sm:$0xff]
  %v1172 = vld [vmem:[%s2 + $0x90] sm:$0xff]
  %v1173 = vld [vmem:[%s2 + $0x98] sm:$0xff]
  %v1174 = vld [vmem:[%s2 + $0xa0] sm:$0xff]
  %v1175 = vld [vmem:[%s2 + $0xa8] sm:$0xff]
  %v1176 = vld [vmem:[%s2 + $0xb0] sm:$0xff]
  %v1177 = vld [vmem:[%s2 + $0xb8] sm:$0xff]
  %v1178 = vld [vmem:[%s2 + $0xc0] sm:$0xff]
  %v1179 = vld [vmem:[%s2 + $0xc8] sm:$0xff]
  %v1180 = vld [vmem:[%s2 + $0xd0] sm:$0xff]
  %v1181 = vld [vmem:[%s2 + $0xd8] sm:$0xff]
  %v1182 = vld [vmem:[%s2 + $0xe0] sm:$0xff]
  %v1183 = vld [vmem:[%s1] sm:$0xff]
  %vm1184 = vcmask 64512
  %v1186 = vsel %vm1184, %v1183, 0
  %1188 = vmatpush.msra.mxu0 0.0
  %1189 = vmatpush.msra.mxu0 0.0
  %1190 = vmatpush.msra.mxu0 0.0
  %1191 = vmatpush.msra.mxu0 0.0
  %1192 = vmatpush.msra.mxu0 0.0
  %1193 = vmatpush.msra.mxu0 0.0
  %1194 = vmatpush.msra.mxu0 0.0
  %1195 = vmatpush.msra.mxu0 0.0
  %1196 = vmatpush.msra.mxu0 0.0
  %1197 = vmatpush.msra.mxu0 0.0
  %1198 = vmatpush.msra.mxu0 0.0
  %1199 = vmatpush.msra.mxu0 0.0
  %1200 = vmatpush.msra.mxu0 0.0
  %1201 = vmatpush.msra.mxu0 0.0
  %1202 = vmatpush.msra.mxu0 0.0
  %1203 = vmatpush.msra.mxu0 %v1173
  %1204 = vmatmul.f32.gmra.mxu0 %v1186
  %v1205 = vpop.f32.mrf.mxu0
  %v1206 = vadd.f32 0.0, %v1205
  %1207 = vdwg.mxu0
  %1209 = vrot.lane.b32.xlu0 %v1168, 32
  %v1210 = vpop.permute.xlu0 %1209
  %v1211 = vsel %vm104, %v1210, 0
  %1213 = vmatpush.msra.mxu0 0.0
  %1214 = vmatpush.msra.mxu0 0.0
  %1215 = vmatpush.msra.mxu0 0.0
  %1216 = vmatpush.msra.mxu0 0.0
  %1217 = vmatpush.msra.mxu0 0.0
  %1218 = vmatpush.msra.mxu0 0.0
  %1219 = vmatpush.msra.mxu0 0.0
  %1220 = vmatpush.msra.mxu0 0.0
  %1221 = vmatpush.msra.mxu0 0.0
  %1222 = vmatpush.msra.mxu0 0.0
  %1223 = vmatpush.msra.mxu0 0.0
  %1224 = vmatpush.msra.mxu0 0.0
  %1225 = vmatpush.msra.mxu0 %v1172
  %1226 = vmatpush.msra.mxu0 %v1171
  %1227 = vmatpush.msra.mxu0 %v1170
  %1228 = vmatpush.msra.mxu0 %v1169
  %1229 = vmatmul.f32.gmra.mxu0 %v1211
  %v1230 = vpop.f32.mrf.mxu0
  %v1231 = vadd.f32 %v1206, %v1230
  %1232 = vdwg.mxu0
  %v1233 = vperm.slane %v1182, 0
  %v1234 = vadd.f32 %v1231, %v1233
  %v1235 = vmax.f32 %v1234, 0.0
  %v1236 = vperm.slane %v1182, 1
  %v1238 = vsel %vm104, %v1235, 0
  %1240 = vmatpush.msra.mxu0 0.0
  %1241 = vmatpush.msra.mxu0 0.0
  %1242 = vmatpush.msra.mxu0 0.0
  %1243 = vmatpush.msra.mxu0 0.0
  %1244 = vmatpush.msra.mxu0 0.0
  %1245 = vmatpush.msra.mxu0 0.0
  %1246 = vmatpush.msra.mxu0 0.0
  %1247 = vmatpush.msra.mxu0 0.0
  %1248 = vmatpush.msra.mxu0 0.0
  %1249 = vmatpush.msra.mxu0 0.0
  %1250 = vmatpush.msra.mxu0 0.0
  %1251 = vmatpush.msra.mxu0 0.0
  %1252 = vmatpush.msra.mxu0 %v1177
  %1253 = vmatpush.msra.mxu0 %v1176
  %1254 = vmatpush.msra.mxu0 %v1175
  %1255 = vmatpush.msra.mxu0 %v1174
  %1256 = vmatmul.f32.gmra.mxu0 %v1238
  %v1257 = vpop.f32.mrf.mxu0
  %v1258 = vadd.f32 %v1236, %v1257
  %1259 = vdwg.mxu0
  %v1260 = vmax.f32 %v1258, 0.0
  %v1261 = vperm.slane %v1182, 2
  %v1263 = vsel %vm104, %v1260, 0
  %1265 = vmatpush.msra.mxu0 0.0
  %1266 = vmatpush.msra.mxu0 0.0
  %1267 = vmatpush.msra.mxu0 0.0
  %1268 = vmatpush.msra.mxu0 0.0
  %1269 = vmatpush.msra.mxu0 0.0
  %1270 = vmatpush.msra.mxu0 0.0
  %1271 = vmatpush.msra.mxu0 0.0
  %1272 = vmatpush.msra.mxu0 0.0
  %1273 = vmatpush.msra.mxu0 0.0
  %1274 = vmatpush.msra.mxu0 0.0
  %1275 = vmatpush.msra.mxu0 0.0
  %1276 = vmatpush.msra.mxu0 0.0
  %1277 = vmatpush.msra.mxu0 %v1181
  %1278 = vmatpush.msra.mxu0 %v1180
  %1279 = vmatpush.msra.mxu0 %v1179
  %1280 = vmatpush.msra.mxu0 %v1178
  %1281 = vmatmul.f32.gmra.mxu0 %v1263
  %v1282 = vpop.f32.mrf.mxu0
  %v1283 = vadd.f32 %v1261, %v1282
  %1284 = vdwg.mxu0
  %vm1285 = vcmask 7168
  %1286 = vst.msk [vmem:[%s3] sm:$0xff] %vm1285, %v1283
  // Predicated region
  $region14: #{multi_lstm_forward.1} parent=0 // pred_check
    _
  $region15: #{multi_lstm_forward.1} parent=0 // pred_check_branch
    %1288 = sbr.rel (0) target = $region17
  $region16: #{multi_lstm_forward.1} parent=0 // pred_region
    _
  $region17: #{multi_lstm_forward.1} parent=0 // pred_fallthru
    _
  // Predicated region
  $region18: #{multi_lstm_forward.1} parent=0 // pred_check
    _
  $region19: #{multi_lstm_forward.1} parent=0 // pred_check_branch
    %1290 = sbr.rel (0) target = $region21
  $region20: #{multi_lstm_forward.1} parent=0 // pred_region
    _
  $region21: #{multi_lstm_forward.1} parent=0 // pred_fallthru
    _

</llo_original>
